<compile_context>
chip_gen: v7x
topology: tpu7x:2x2x1
jax: 0.10.0
libtpu: 0.0.40
codegen_flags: <defaults>
</compile_context>

<pallas_src>
import jax
import jax.numpy as jnp
from jax.experimental import pallas as pl
from jax.experimental.pallas import tpu as pltpu
import numpy as np


# ---------------------------------------------------------------------------
# Kernel: fused two-head 3-layer MLP (Linear->ReLU->Linear->ReLU->Linear) x2
# ---------------------------------------------------------------------------
def _critic_kernel(x_ref, a_ref,
                   w1s_ref, w1a_ref, b1_ref, w2_ref, b2_ref, w3_ref, b3_ref,
                   w4s_ref, w4a_ref, b4_ref, w5_ref, b5_ref, w6_ref, b6_ref,
                   o_ref):
    x = x_ref[...]          # (TB, state_dim) f32
    a = a_ref[...]          # (TB, action_dim) f32

    def q_head(w_s, w_a, b1, w2, b2, w3, b3):
        # Layer 1: split-K dot replaces the concat([x, a]) @ W1 of the spec.
        h = jnp.dot(x, w_s[...].astype(jnp.float32),
                    preferred_element_type=jnp.float32)
        h = h + jnp.dot(a, w_a[...].astype(jnp.float32),
                        preferred_element_type=jnp.float32)
        h = jnp.maximum(h + b1[...], 0.0)
        # Layer 2
        h = jnp.dot(h, w2[...].astype(jnp.float32),
                    preferred_element_type=jnp.float32)
        h = jnp.maximum(h + b2[...], 0.0)
        # Layer 3 (N = 1)
        return jnp.dot(h, w3[...].astype(jnp.float32),
                       preferred_element_type=jnp.float32) + b3[...]

    q1 = q_head(w1s_ref, w1a_ref, b1_ref, w2_ref, b2_ref, w3_ref, b3_ref)
    q2 = q_head(w4s_ref, w4a_ref, b4_ref, w5_ref, b5_ref, w6_ref, b6_ref)

    # Assemble a single lane-dense (TB, 2) store instead of two (TB, 1) ones.
    col = jax.lax.broadcasted_iota(jnp.int32, o_ref.shape, 1)
    o_ref[...] = jnp.where(col == 0, q1, q2)


# ---------------------------------------------------------------------------
# Wrapper
# ---------------------------------------------------------------------------
_PARAM_ORDER = ("w1s", "w1a", "b1", "w2", "b2", "w3", "b3",
                "w4s", "w4a", "b4", "w5", "b5", "w6", "b6")


def _round_up(n, m):
    return ((n + m - 1) // m) * m


def _pick_batch_tile(B):
    """Returns (tile, padded_batch). Tile second-minor dim is sublane-friendly."""
    if B <= 8:
        return B, B                      # single full-extent block, no padding
    if B <= 128:
        bp = _round_up(B, 8)
        return bp, bp
    return 128, _round_up(B, 128)        # pipeline / shard batch tiles


def critic_forward(x, a, params):
    """Mirrors Critic.forward: returns (Q1, Q2), each of shape [B, 1]."""
    B, state_dim = x.shape
    action_dim = a.shape[1]
    tb, b_pad = _pick_batch_tile(B)
    if b_pad != B:
        x = jnp.pad(x, ((0, b_pad - B), (0, 0)))
        a = jnp.pad(a, ((0, b_pad - B), (0, 0)))

    weights = [params[k] for k in _PARAM_ORDER]

    def act_spec(feat):
        return pl.BlockSpec((tb, feat), lambda i: (i, 0))

    def weight_spec(shape):
        # Constant index_map: block never changes -> stays resident in VMEM.
        return pl.BlockSpec(shape, lambda i: (0,) * len(shape))

    q12 = pl.pallas_call(
        _critic_kernel,
        out_shape=jax.ShapeDtypeStruct((b_pad, 2), jnp.float32),
        grid=(b_pad // tb,),
        in_specs=[act_spec(state_dim), act_spec(action_dim)]
                 + [weight_spec(w.shape) for w in weights],
        out_specs=pl.BlockSpec((tb, 2), lambda i: (i, 0)),
        compiler_params=pltpu.CompilerParams(
            dimension_semantics=("parallel",)),
    )(x, a, *weights)

    return q12[:B, 0:1], q12[:B, 1:2]


def critic_Q1(x, a, params):
    """Mirrors Critic.Q1 (reuses the fused kernel; Q2 column is discarded)."""
    return critic_forward(x, a, params)[0]


# ---------------------------------------------------------------------------
# Parameter init (matches nn.Linear default U[-1/sqrt(fan_in), +1/sqrt(fan_in)])
# ---------------------------------------------------------------------------
def init_critic_params(key, state_dim, action_dim):
    in_dim = state_dim + action_dim

    def linear(k, fan_in, fan_out):
        kw, kb = jax.random.split(k)
        bound = 1.0 / np.sqrt(fan_in)
        w = jax.random.uniform(kw, (fan_in, fan_out), jnp.float32, -bound, bound)
        b = jax.random.uniform(kb, (1, fan_out), jnp.float32, -bound, bound)
        return w, b

    k1, k2, k3, k4, k5, k6 = jax.random.split(key, 6)
    w1, b1 = linear(k1, in_dim, 400)
    w2, b2 = linear(k2, 400, 300)
    w3, b3 = linear(k3, 300, 1)
    w4, b4 = linear(k4, in_dim, 400)
    w5, b5 = linear(k5, 400, 300)
    w6, b6 = linear(k6, 300, 1)

    # Kernel-friendly storage: layer-1 weights split at the state/action
    # boundary (removes the wrapper-side concat); large matrices held in
    # bf16 to halve HBM->VMEM DMA bytes (upcast to f32 inside the kernel).
    bf16 = jnp.bfloat16
    return {
        "w1s": w1[:state_dim].astype(bf16), "w1a": w1[state_dim:].astype(bf16),
        "b1": b1, "w2": w2.astype(bf16), "b2": b2,
        "w3": w3.astype(bf16), "b3": b3,
        "w4s": w4[:state_dim].astype(bf16), "w4a": w4[state_dim:].astype(bf16),
        "b4": b4, "w5": w5.astype(bf16), "b5": b5,
        "w6": w6.astype(bf16), "b6": b6,
    }
    # TODO(synk): hidden widths 400/300 are kept as defined by the module
    # (not padded to 128-multiples) to keep DMA bytes minimal.


# ---------------------------------------------------------------------------
# Plain-JAX reference (faithful to the PyTorch forward, f32 math)
# ---------------------------------------------------------------------------
def reference_forward(x, a, params):
    f32 = lambda k: params[k].astype(jnp.float32)
    c = jnp.concatenate([x, a], axis=1)
    w1 = jnp.concatenate([f32("w1s"), f32("w1a")], axis=0)
    w4 = jnp.concatenate([f32("w4s"), f32("w4a")], axis=0)
    h = jnp.maximum(c @ w1 + params["b1"], 0.0)
    h = jnp.maximum(h @ f32("w2") + params["b2"], 0.0)
    q1 = h @ f32("w3") + params["b3"]
    h = jnp.maximum(c @ w4 + params["b4"], 0.0)
    h = jnp.maximum(h @ f32("w5") + params["b5"], 0.0)
    q2 = h @ f32("w6") + params["b6"]
    return q1, q2


if __name__ == "__main__":
    key = jax.random.PRNGKey(0)
    k_param, k_x, k_a = jax.random.split(key, 3)

    batch, state_dim, action_dim = 2, 8, 4
    params = init_critic_params(k_param, state_dim, action_dim)

    x = jax.random.normal(k_x, (batch, state_dim), dtype=jnp.float32)
    a = jax.random.normal(k_a, (batch, action_dim), dtype=jnp.float32)

    fwd = jax.jit(critic_forward)
    q1, q2 = fwd(x, a, params)
    jax.block_until_ready((q1, q2))

    r1, r2 = reference_forward(x, a, params)
    np.testing.assert_allclose(np.asarray(q1), np.asarray(r1), rtol=1e-4, atol=1e-5)
    np.testing.assert_allclose(np.asarray(q2), np.asarray(r2), rtol=1e-4, atol=1e-5)
    assert q1.shape == (batch, 1) and q2.shape == (batch, 1)

    print("KERNEL_OK")
</pallas_src>

<mosaic_0001>
module attributes {stable_mosaic.version = 11 : i64} {
  func.func @_critic_kernel(%arg0: i32, %arg1: memref<2x8xf32, #tpu.memory_space<vmem>>, %arg2: memref<2x4xf32, #tpu.memory_space<vmem>>, %arg3: memref<8x400xbf16, #tpu.memory_space<vmem>>, %arg4: memref<4x400xbf16, #tpu.memory_space<vmem>>, %arg5: memref<1x400xf32, #tpu.memory_space<vmem>>, %arg6: memref<400x300xbf16, #tpu.memory_space<vmem>>, %arg7: memref<1x300xf32, #tpu.memory_space<vmem>>, %arg8: memref<300x1xbf16, #tpu.memory_space<vmem>>, %arg9: memref<1x1xf32, #tpu.memory_space<vmem>>, %arg10: memref<8x400xbf16, #tpu.memory_space<vmem>>, %arg11: memref<4x400xbf16, #tpu.memory_space<vmem>>, %arg12: memref<1x400xf32, #tpu.memory_space<vmem>>, %arg13: memref<400x300xbf16, #tpu.memory_space<vmem>>, %arg14: memref<1x300xf32, #tpu.memory_space<vmem>>, %arg15: memref<300x1xbf16, #tpu.memory_space<vmem>>, %arg16: memref<1x1xf32, #tpu.memory_space<vmem>>, %arg17: memref<2x2xf32, #tpu.memory_space<vmem>>) attributes {dimension_semantics = [#tpu.dimension_semantics<parallel>], iteration_bounds = array<i64: 1>, scalar_prefetch = 0 : i64, scratch_operands = 0 : i64, tpu.core_type = #tpu.core_type<tc>, window_params = [{transform_indices = @transform_0, window_bounds = array<i64: 2, 8>}, {transform_indices = @transform_1, window_bounds = array<i64: 2, 4>}, {pipeline_mode = #tpu.pipeline_mode<synchronous>, transform_indices = @transform_2, window_bounds = array<i64: 8, 400>}, {pipeline_mode = #tpu.pipeline_mode<synchronous>, transform_indices = @transform_3, window_bounds = array<i64: 4, 400>}, {pipeline_mode = #tpu.pipeline_mode<synchronous>, transform_indices = @transform_4, window_bounds = array<i64: 1, 400>}, {pipeline_mode = #tpu.pipeline_mode<synchronous>, transform_indices = @transform_5, window_bounds = array<i64: 400, 300>}, {pipeline_mode = #tpu.pipeline_mode<synchronous>, transform_indices = @transform_6, window_bounds = array<i64: 1, 300>}, {pipeline_mode = #tpu.pipeline_mode<synchronous>, transform_indices = @transform_7, window_bounds = array<i64: 300, 1>}, {pipeline_mode = #tpu.pipeline_mode<synchronous>, transform_indices = @transform_8, window_bounds = array<i64: 1, 1>}, {pipeline_mode = #tpu.pipeline_mode<synchronous>, transform_indices = @transform_9, window_bounds = array<i64: 8, 400>}, {pipeline_mode = #tpu.pipeline_mode<synchronous>, transform_indices = @transform_10, window_bounds = array<i64: 4, 400>}, {pipeline_mode = #tpu.pipeline_mode<synchronous>, transform_indices = @transform_11, window_bounds = array<i64: 1, 400>}, {pipeline_mode = #tpu.pipeline_mode<synchronous>, transform_indices = @transform_12, window_bounds = array<i64: 400, 300>}, {pipeline_mode = #tpu.pipeline_mode<synchronous>, transform_indices = @transform_13, window_bounds = array<i64: 1, 300>}, {pipeline_mode = #tpu.pipeline_mode<synchronous>, transform_indices = @transform_14, window_bounds = array<i64: 300, 1>}, {pipeline_mode = #tpu.pipeline_mode<synchronous>, transform_indices = @transform_15, window_bounds = array<i64: 1, 1>}, {transform_indices = @transform_16, window_bounds = array<i64: 2, 2>}]} {
    %c0 = arith.constant 0 : index
    %c0_0 = arith.constant 0 : index
    %0 = vector.load %arg1[%c0, %c0_0] : memref<2x8xf32, #tpu.memory_space<vmem>>, vector<2x8xf32>
    %c0_1 = arith.constant 0 : index
    %c0_2 = arith.constant 0 : index
    %1 = vector.load %arg2[%c0_1, %c0_2] : memref<2x4xf32, #tpu.memory_space<vmem>>, vector<2x4xf32>
    %c0_3 = arith.constant 0 : index
    %c0_4 = arith.constant 0 : index
    %2 = vector.load %arg3[%c0_3, %c0_4] : memref<8x400xbf16, #tpu.memory_space<vmem>>, vector<8x400xbf16>
    %3 = arith.extf %2 : vector<8x400xbf16> to vector<8x400xf32>
    %cst = arith.constant dense<0.000000e+00> : vector<2x400xf32>
    %4 = tpu.matmul %0, %3, %cst {dimension_numbers = #tpu.dot_dimension_numbers<[1], [0], [0], [1], [0, 0, 1, 1], [], []>} : vector<2x8xf32>, vector<8x400xf32>, vector<2x400xf32> -> vector<2x400xf32>
    %c0_5 = arith.constant 0 : index
    %c0_6 = arith.constant 0 : index
    %5 = vector.load %arg4[%c0_5, %c0_6] : memref<4x400xbf16, #tpu.memory_space<vmem>>, vector<4x400xbf16>
    %6 = arith.extf %5 : vector<4x400xbf16> to vector<4x400xf32>
    %cst_7 = arith.constant dense<0.000000e+00> : vector<2x400xf32>
    %7 = tpu.matmul %1, %6, %cst_7 {dimension_numbers = #tpu.dot_dimension_numbers<[1], [0], [0], [1], [0, 0, 1, 1], [], []>} : vector<2x4xf32>, vector<4x400xf32>, vector<2x400xf32> -> vector<2x400xf32>
    %8 = arith.addf %4, %7 : vector<2x400xf32>
    %c0_8 = arith.constant 0 : index
    %c0_9 = arith.constant 0 : index
    %9 = vector.load %arg5[%c0_8, %c0_9] : memref<1x400xf32, #tpu.memory_space<vmem>>, vector<1x400xf32>
    %10 = vector.broadcast %9 : vector<1x400xf32> to vector<2x400xf32>
    %11 = arith.addf %8, %10 : vector<2x400xf32>
    %cst_10 = arith.constant 0.000000e+00 : f32
    %12 = vector.broadcast %cst_10 : f32 to vector<2x400xf32>
    %13 = arith.maximumf %11, %12 : vector<2x400xf32>
    %c0_11 = arith.constant 0 : index
    %c0_12 = arith.constant 0 : index
    %14 = vector.load %arg6[%c0_11, %c0_12] : memref<400x300xbf16, #tpu.memory_space<vmem>>, vector<400x300xbf16>
    %15 = arith.extf %14 : vector<400x300xbf16> to vector<400x300xf32>
    %cst_13 = arith.constant dense<0.000000e+00> : vector<2x300xf32>
    %16 = tpu.matmul %13, %15, %cst_13 {dimension_numbers = #tpu.dot_dimension_numbers<[1], [0], [0], [1], [0, 0, 1, 1], [], []>} : vector<2x400xf32>, vector<400x300xf32>, vector<2x300xf32> -> vector<2x300xf32>
    %c0_14 = arith.constant 0 : index
    %c0_15 = arith.constant 0 : index
    %17 = vector.load %arg7[%c0_14, %c0_15] : memref<1x300xf32, #tpu.memory_space<vmem>>, vector<1x300xf32>
    %18 = vector.broadcast %17 : vector<1x300xf32> to vector<2x300xf32>
    %19 = arith.addf %16, %18 : vector<2x300xf32>
    %cst_16 = arith.constant 0.000000e+00 : f32
    %20 = vector.broadcast %cst_16 : f32 to vector<2x300xf32>
    %21 = arith.maximumf %19, %20 : vector<2x300xf32>
    %c0_17 = arith.constant 0 : index
    %c0_18 = arith.constant 0 : index
    %22 = vector.load %arg8[%c0_17, %c0_18] : memref<300x1xbf16, #tpu.memory_space<vmem>>, vector<300x1xbf16>
    %23 = arith.extf %22 : vector<300x1xbf16> to vector<300x1xf32>
    %cst_19 = arith.constant dense<0.000000e+00> : vector<2x1xf32>
    %24 = tpu.matmul %21, %23, %cst_19 {dimension_numbers = #tpu.dot_dimension_numbers<[1], [0], [0], [1], [0, 0, 1, 1], [], []>} : vector<2x300xf32>, vector<300x1xf32>, vector<2x1xf32> -> vector<2x1xf32>
    %c0_20 = arith.constant 0 : index
    %c0_21 = arith.constant 0 : index
    %25 = vector.load %arg9[%c0_20, %c0_21] : memref<1x1xf32, #tpu.memory_space<vmem>>, vector<1x1xf32>
    %26 = vector.broadcast %25 : vector<1x1xf32> to vector<2x1xf32>
    %27 = arith.addf %24, %26 : vector<2x1xf32>
    %c0_22 = arith.constant 0 : index
    %c0_23 = arith.constant 0 : index
    %28 = vector.load %arg10[%c0_22, %c0_23] : memref<8x400xbf16, #tpu.memory_space<vmem>>, vector<8x400xbf16>
    %29 = arith.extf %28 : vector<8x400xbf16> to vector<8x400xf32>
    %cst_24 = arith.constant dense<0.000000e+00> : vector<2x400xf32>
    %30 = tpu.matmul %0, %29, %cst_24 {dimension_numbers = #tpu.dot_dimension_numbers<[1], [0], [0], [1], [0, 0, 1, 1], [], []>} : vector<2x8xf32>, vector<8x400xf32>, vector<2x400xf32> -> vector<2x400xf32>
    %c0_25 = arith.constant 0 : index
    %c0_26 = arith.constant 0 : index
    %31 = vector.load %arg11[%c0_25, %c0_26] : memref<4x400xbf16, #tpu.memory_space<vmem>>, vector<4x400xbf16>
    %32 = arith.extf %31 : vector<4x400xbf16> to vector<4x400xf32>
    %cst_27 = arith.constant dense<0.000000e+00> : vector<2x400xf32>
    %33 = tpu.matmul %1, %32, %cst_27 {dimension_numbers = #tpu.dot_dimension_numbers<[1], [0], [0], [1], [0, 0, 1, 1], [], []>} : vector<2x4xf32>, vector<4x400xf32>, vector<2x400xf32> -> vector<2x400xf32>
    %34 = arith.addf %30, %33 : vector<2x400xf32>
    %c0_28 = arith.constant 0 : index
    %c0_29 = arith.constant 0 : index
    %35 = vector.load %arg12[%c0_28, %c0_29] : memref<1x400xf32, #tpu.memory_space<vmem>>, vector<1x400xf32>
    %36 = vector.broadcast %35 : vector<1x400xf32> to vector<2x400xf32>
    %37 = arith.addf %34, %36 : vector<2x400xf32>
    %cst_30 = arith.constant 0.000000e+00 : f32
    %38 = vector.broadcast %cst_30 : f32 to vector<2x400xf32>
    %39 = arith.maximumf %37, %38 : vector<2x400xf32>
    %c0_31 = arith.constant 0 : index
    %c0_32 = arith.constant 0 : index
    %40 = vector.load %arg13[%c0_31, %c0_32] : memref<400x300xbf16, #tpu.memory_space<vmem>>, vector<400x300xbf16>
    %41 = arith.extf %40 : vector<400x300xbf16> to vector<400x300xf32>
    %cst_33 = arith.constant dense<0.000000e+00> : vector<2x300xf32>
    %42 = tpu.matmul %39, %41, %cst_33 {dimension_numbers = #tpu.dot_dimension_numbers<[1], [0], [0], [1], [0, 0, 1, 1], [], []>} : vector<2x400xf32>, vector<400x300xf32>, vector<2x300xf32> -> vector<2x300xf32>
    %c0_34 = arith.constant 0 : index
    %c0_35 = arith.constant 0 : index
    %43 = vector.load %arg14[%c0_34, %c0_35] : memref<1x300xf32, #tpu.memory_space<vmem>>, vector<1x300xf32>
    %44 = vector.broadcast %43 : vector<1x300xf32> to vector<2x300xf32>
    %45 = arith.addf %42, %44 : vector<2x300xf32>
    %cst_36 = arith.constant 0.000000e+00 : f32
    %46 = vector.broadcast %cst_36 : f32 to vector<2x300xf32>
    %47 = arith.maximumf %45, %46 : vector<2x300xf32>
    %c0_37 = arith.constant 0 : index
    %c0_38 = arith.constant 0 : index
    %48 = vector.load %arg15[%c0_37, %c0_38] : memref<300x1xbf16, #tpu.memory_space<vmem>>, vector<300x1xbf16>
    %49 = arith.extf %48 : vector<300x1xbf16> to vector<300x1xf32>
    %cst_39 = arith.constant dense<0.000000e+00> : vector<2x1xf32>
    %50 = tpu.matmul %47, %49, %cst_39 {dimension_numbers = #tpu.dot_dimension_numbers<[1], [0], [0], [1], [0, 0, 1, 1], [], []>} : vector<2x300xf32>, vector<300x1xf32>, vector<2x1xf32> -> vector<2x1xf32>
    %c0_40 = arith.constant 0 : index
    %c0_41 = arith.constant 0 : index
    %51 = vector.load %arg16[%c0_40, %c0_41] : memref<1x1xf32, #tpu.memory_space<vmem>>, vector<1x1xf32>
    %52 = vector.broadcast %51 : vector<1x1xf32> to vector<2x1xf32>
    %53 = arith.addf %50, %52 : vector<2x1xf32>
    %54 = tpu.iota {dimensions = array<i32: 1>} : vector<2x2xi32>
    %c0_i32 = arith.constant 0 : i32
    %55 = vector.broadcast %c0_i32 : i32 to vector<2x2xi32>
    %56 = arith.cmpi eq, %54, %55 : vector<2x2xi32>
    %57 = vector.shape_cast %27 : vector<2x1xf32> to vector<2x1xf32>
    %58 = vector.broadcast %57 : vector<2x1xf32> to vector<2x2xf32>
    %59 = vector.shape_cast %53 : vector<2x1xf32> to vector<2x1xf32>
    %60 = vector.broadcast %59 : vector<2x1xf32> to vector<2x2xf32>
    %61 = arith.select %56, %58, %60 : vector<2x2xi1>, vector<2x2xf32>
    %c0_42 = arith.constant 0 : index
    %c0_43 = arith.constant 0 : index
    %62 = vector.load %arg17[%c0_42, %c0_43] : memref<2x2xf32, #tpu.memory_space<vmem>>, vector<2x2xf32>
    tpu.vector_store %arg17[%c0_42, %c0_43], %61 {strides = array<i32>} : memref<2x2xf32, #tpu.memory_space<vmem>>, vector<2x2xf32>,
    return
  }
  func.func @transform_0(%arg0: i32) -> (i32, i32) {
    %c0_i32 = arith.constant 0 : i32
    %c0_i32_0 = arith.constant 0 : i32
    return %arg0, %c0_i32 : i32, i32
  }
  func.func @transform_1(%arg0: i32) -> (i32, i32) {
    %c0_i32 = arith.constant 0 : i32
    %c0_i32_0 = arith.constant 0 : i32
    return %arg0, %c0_i32 : i32, i32
  }
  func.func @transform_2(%arg0: i32) -> (i32, i32) {
    %c0_i32 = arith.constant 0 : i32
    %c0_i32_0 = arith.constant 0 : i32
    %c0_i32_1 = arith.constant 0 : i32
    return %c0_i32, %c0_i32_0 : i32, i32
  }
  func.func @transform_3(%arg0: i32) -> (i32, i32) {
    %c0_i32 = arith.constant 0 : i32
    %c0_i32_0 = arith.constant 0 : i32
    %c0_i32_1 = arith.constant 0 : i32
    return %c0_i32, %c0_i32_0 : i32, i32
  }
  func.func @transform_4(%arg0: i32) -> (i32, i32) {
    %c0_i32 = arith.constant 0 : i32
    %c0_i32_0 = arith.constant 0 : i32
    %c0_i32_1 = arith.constant 0 : i32
    return %c0_i32, %c0_i32_0 : i32, i32
  }
  func.func @transform_5(%arg0: i32) -> (i32, i32) {
    %c0_i32 = arith.constant 0 : i32
    %c0_i32_0 = arith.constant 0 : i32
    %c0_i32_1 = arith.constant 0 : i32
    return %c0_i32, %c0_i32_0 : i32, i32
  }
  func.func @transform_6(%arg0: i32) -> (i32, i32) {
    %c0_i32 = arith.constant 0 : i32
    %c0_i32_0 = arith.constant 0 : i32
    %c0_i32_1 = arith.constant 0 : i32
    return %c0_i32, %c0_i32_0 : i32, i32
  }
  func.func @transform_7(%arg0: i32) -> (i32, i32) {
    %c0_i32 = arith.constant 0 : i32
    %c0_i32_0 = arith.constant 0 : i32
    %c0_i32_1 = arith.constant 0 : i32
    return %c0_i32, %c0_i32_0 : i32, i32
  }
  func.func @transform_8(%arg0: i32) -> (i32, i32) {
    %c0_i32 = arith.constant 0 : i32
    %c0_i32_0 = arith.constant 0 : i32
    %c0_i32_1 = arith.constant 0 : i32
    return %c0_i32, %c0_i32_0 : i32, i32
  }
  func.func @transform_9(%arg0: i32) -> (i32, i32) {
    %c0_i32 = arith.constant 0 : i32
    %c0_i32_0 = arith.constant 0 : i32
    %c0_i32_1 = arith.constant 0 : i32
    return %c0_i32, %c0_i32_0 : i32, i32
  }
  func.func @transform_10(%arg0: i32) -> (i32, i32) {
    %c0_i32 = arith.constant 0 : i32
    %c0_i32_0 = arith.constant 0 : i32
    %c0_i32_1 = arith.constant 0 : i32
    return %c0_i32, %c0_i32_0 : i32, i32
  }
  func.func @transform_11(%arg0: i32) -> (i32, i32) {
    %c0_i32 = arith.constant 0 : i32
    %c0_i32_0 = arith.constant 0 : i32
    %c0_i32_1 = arith.constant 0 : i32
    return %c0_i32, %c0_i32_0 : i32, i32
  }
  func.func @transform_12(%arg0: i32) -> (i32, i32) {
    %c0_i32 = arith.constant 0 : i32
    %c0_i32_0 = arith.constant 0 : i32
    %c0_i32_1 = arith.constant 0 : i32
    return %c0_i32, %c0_i32_0 : i32, i32
  }
  func.func @transform_13(%arg0: i32) -> (i32, i32) {
    %c0_i32 = arith.constant 0 : i32
    %c0_i32_0 = arith.constant 0 : i32
    %c0_i32_1 = arith.constant 0 : i32
    return %c0_i32, %c0_i32_0 : i32, i32
  }
  func.func @transform_14(%arg0: i32) -> (i32, i32) {
    %c0_i32 = arith.constant 0 : i32
    %c0_i32_0 = arith.constant 0 : i32
    %c0_i32_1 = arith.constant 0 : i32
    return %c0_i32, %c0_i32_0 : i32, i32
  }
  func.func @transform_15(%arg0: i32) -> (i32, i32) {
    %c0_i32 = arith.constant 0 : i32
    %c0_i32_0 = arith.constant 0 : i32
    %c0_i32_1 = arith.constant 0 : i32
    return %c0_i32, %c0_i32_0 : i32, i32
  }
  func.func @transform_16(%arg0: i32) -> (i32, i32) {
    %c0_i32 = arith.constant 0 : i32
    %c0_i32_0 = arith.constant 0 : i32
    return %arg0, %c0_i32 : i32, i32
  }
}

</mosaic_0001>

<llo_original>
// kernel: critic_forward.1
$region0: #{critic_forward.1}
  #allocation0 [shape = 'u32[]', space=smem, size = 0x4, offset = 0x4, fixed_abs, tag = 'smem constant byte address 0x4 - core index']
  #allocation1 [shape = 'u32[144,128]{1,0:T(1,128)}', space=vmem, size = 0x12000, scoped, tag = 'internal scratch']
  #allocation2 [shape = 'f32[1,1]{1,0:T(1,128)S(1)}', space=vmem, size = 0x200, scoped, tag = 'scoped memory for critic_forward.1']
  #allocation3 [shape = 'f32[1,1]{1,0:T(1,128)S(1)}', space=vmem, size = 0x200, scoped, tag = 'scoped memory for critic_forward.1']
  %s0 = inlined_call_operand.vmem [shape: f32[2,8], index: 0, kind: input, shape index: {}]
  %s1 = inlined_call_operand.vmem [shape: f32[2,4], index: 1, kind: input, shape index: {}]
  %s2 = inlined_call_operand.vmem [shape: bf16[8,400], index: 2, kind: input, shape index: {}]
  %s3 = inlined_call_operand.vmem [shape: bf16[4,400], index: 3, kind: input, shape index: {}]
  %s4 = inlined_call_operand.vmem [shape: f32[1,400], index: 4, kind: input, shape index: {}]
  %s5 = inlined_call_operand.hbm [shape: bf16[400,300], index: 5, kind: input, shape index: {}]
  %s6 = inlined_call_operand.vmem [shape: f32[1,300], index: 6, kind: input, shape index: {}]
  %s7 = inlined_call_operand.vmem [shape: bf16[300,1], index: 7, kind: input, shape index: {}]
  %s8 = inlined_call_operand.<no memory space> [shape: f32[1,1], index: 8, kind: input, shape index: {}]
  %s9 = inlined_call_operand.vmem [shape: bf16[8,400], index: 9, kind: input, shape index: {}]
  %s10 = inlined_call_operand.vmem [shape: bf16[4,400], index: 10, kind: input, shape index: {}]
  %s11 = inlined_call_operand.vmem [shape: f32[1,400], index: 11, kind: input, shape index: {}]
  %s12 = inlined_call_operand.hbm [shape: bf16[400,300], index: 12, kind: input, shape index: {}]
  %s13 = inlined_call_operand.vmem [shape: f32[1,300], index: 13, kind: input, shape index: {}]
  %s14 = inlined_call_operand.vmem [shape: bf16[300,1], index: 14, kind: input, shape index: {}]
  %s15 = inlined_call_operand.<no memory space> [shape: f32[1,1], index: 15, kind: input, shape index: {}]
  %s16 = inlined_call_operand.vmem [shape: f32[2,2], index: 16, kind: output, shape index: {}]
  %s17 = sld [smem:[#allocation0]]
  $region82: #{critic_forward.1} parent=0
    _
  %s19 = ssub.s32 1, %s17
  %s20 = scalar_select 0, %s19, %s17
  %v21 = vstv %s8
  %22 = vst [vmem:[#allocation2] sm:$0x1] %v21
  %v23 = vstv %s15
  %24 = vst [vmem:[#allocation3] sm:$0x1] %v23
  $region1: #{critic_forward.1} parent=0
    #allocation4 [shape = 'u8[307200]{0}', space=vmem, size = 0x4b000, scoped, tag = 'input window, operand 5, single buffered']
    #allocation5 [shape = 's32[1]{0}', space=sflag, size = 0x4, scoped, tag = 'scoped memory for critic_forward.1']
    #allocation6 [shape = 'u8[307200]{0}', space=vmem, size = 0x4b000, scoped, tag = 'input window, operand 12, single buffered']
    #allocation7 [shape = 's32[1]{0}', space=sflag, size = 0x4, scoped, tag = 'scoped memory for critic_forward.1']
    %25 = vsyncpa [#allocation5], 0
    %26 = vsyncpa [#allocation7], 0
    // Predicated region
    $region2: #{critic_forward.1} parent=1 // pred_check
      _
    $region3: #{critic_forward.1} parent=1 // pred_check_branch
      %28 = sbr.rel (0) target = $region5
    $region4: #{critic_forward.1} parent=1 // pred_region
      _
    $region5: #{critic_forward.1} parent=1 // pred_fallthru
      _
    // Predicated region
    $region6: #{critic_forward.1} parent=1 // pred_check
      _
    $region7: #{critic_forward.1} parent=1 // pred_check_branch
      %30 = sbr.rel (0) target = $region9
    $region8: #{critic_forward.1} parent=1 // pred_region
      _
    $region9: #{critic_forward.1} parent=1 // pred_fallthru
      _
    // Predicated region
    $region10: #{critic_forward.1} parent=1 // pred_check
      _
    $region11: #{critic_forward.1} parent=1 // pred_check_branch
      %32 = sbr.rel (0) target = $region13
    $region12: #{critic_forward.1} parent=1 // pred_region
      _
    $region13: #{critic_forward.1} parent=1 // pred_fallthru
      _
    // Predicated region
    $region14: #{critic_forward.1} parent=1 // pred_check
      _
    $region15: #{critic_forward.1} parent=1 // pred_check_branch
      %34 = sbr.rel (0) target = $region17
    $region16: #{critic_forward.1} parent=1 // pred_region
      _
    $region17: #{critic_forward.1} parent=1 // pred_fallthru
      _
    // Predicated region
    $region18: #{critic_forward.1} parent=1 // pred_check
      _
    $region19: #{critic_forward.1} parent=1 // pred_check_branch
      %36 = sbr.rel (0) target = $region21
    $region20: #{critic_forward.1} parent=1 // pred_region
      _
    $region21: #{critic_forward.1} parent=1 // pred_fallthru
      _
    // Predicated region
    $region22: #{critic_forward.1} parent=1 // pred_check
      _
    $region23: #{critic_forward.1} parent=1 // pred_check_branch
      %38 = sbr.rel (0) target = $region25
    $region24: #{critic_forward.1} parent=1 // pred_region
      %s40 = ssub.s32 9600, 9600
      %41 = vsyncadd [#allocation5], %s40
      %s42 = sshll.u32 [#allocation4], 4
      %s43 = int_to_ptr.vmem [resolvable:$true] %s42
      %48 = dma.hbm_to_vmem [thread:$0]  %s5, 9600, %s43, [#allocation5], 192, 192, 12
    $region25: #{critic_forward.1} parent=1 // pred_fallthru
      _
    // Predicated region
    $region26: #{critic_forward.1} parent=1 // pred_check
      _
    $region27: #{critic_forward.1} parent=1 // pred_check_branch
      %50 = sbr.rel (0) target = $region29
    $region28: #{critic_forward.1} parent=1 // pred_region
      _
    $region29: #{critic_forward.1} parent=1 // pred_fallthru
      _
    // Predicated region
    $region30: #{critic_forward.1} parent=1 // pred_check
      _
    $region31: #{critic_forward.1} parent=1 // pred_check_branch
      %52 = sbr.rel (0) target = $region33
    $region32: #{critic_forward.1} parent=1 // pred_region
      _
    $region33: #{critic_forward.1} parent=1 // pred_fallthru
      _
    // Predicated region
    $region34: #{critic_forward.1} parent=1 // pred_check
      _
    $region35: #{critic_forward.1} parent=1 // pred_check_branch
      %54 = sbr.rel (0) target = $region37
    $region36: #{critic_forward.1} parent=1 // pred_region
      _
    $region37: #{critic_forward.1} parent=1 // pred_fallthru
      _
    // Predicated region
    $region38: #{critic_forward.1} parent=1 // pred_check
      _
    $region39: #{critic_forward.1} parent=1 // pred_check_branch
      %56 = sbr.rel (0) target = $region41
    $region40: #{critic_forward.1} parent=1 // pred_region
      _
    $region41: #{critic_forward.1} parent=1 // pred_fallthru
      _
    // Predicated region
    $region42: #{critic_forward.1} parent=1 // pred_check
      _
    $region43: #{critic_forward.1} parent=1 // pred_check_branch
      %58 = sbr.rel (0) target = $region45
    $region44: #{critic_forward.1} parent=1 // pred_region
      _
    $region45: #{critic_forward.1} parent=1 // pred_fallthru
      _
    // Predicated region
    $region46: #{critic_forward.1} parent=1 // pred_check
      _
    $region47: #{critic_forward.1} parent=1 // pred_check_branch
      %60 = sbr.rel (0) target = $region49
    $region48: #{critic_forward.1} parent=1 // pred_region
      _
    $region49: #{critic_forward.1} parent=1 // pred_fallthru
      _
    // Predicated region
    $region50: #{critic_forward.1} parent=1 // pred_check
      _
    $region51: #{critic_forward.1} parent=1 // pred_check_branch
      %62 = sbr.rel (0) target = $region53
    $region52: #{critic_forward.1} parent=1 // pred_region
      %s64 = ssub.s32 9600, 9600
      %65 = vsyncadd [#allocation7], %s64
      %s66 = sshll.u32 [#allocation6], 4
      %s67 = int_to_ptr.vmem [resolvable:$true] %s66
      %72 = dma.hbm_to_vmem [thread:$0]  %s12, 9600, %s67, [#allocation7], 192, 192, 12
    $region53: #{critic_forward.1} parent=1 // pred_fallthru
      _
    // Predicated region
    $region54: #{critic_forward.1} parent=1 // pred_check
      _
    $region55: #{critic_forward.1} parent=1 // pred_check_branch
      %74 = sbr.rel (0) target = $region57
    $region56: #{critic_forward.1} parent=1 // pred_region
      _
    $region57: #{critic_forward.1} parent=1 // pred_fallthru
      _
    // Predicated region
    $region58: #{critic_forward.1} parent=1 // pred_check
      _
    $region59: #{critic_forward.1} parent=1 // pred_check_branch
      %76 = sbr.rel (0) target = $region61
    $region60: #{critic_forward.1} parent=1 // pred_region
      _
    $region61: #{critic_forward.1} parent=1 // pred_fallthru
      _
    // Predicated region
    $region62: #{critic_forward.1} parent=1 // pred_check
      _
    $region63: #{critic_forward.1} parent=1 // pred_check_branch
      %78 = sbr.rel (0) target = $region65
    $region64: #{critic_forward.1} parent=1 // pred_region
      _
    $region65: #{critic_forward.1} parent=1 // pred_fallthru
      _
    // Predicated region
    $region66: #{critic_forward.1} parent=1 // pred_check
      _
    $region67: #{critic_forward.1} parent=1 // pred_check_branch
      %80 = sbr.rel (0) target = $region69
    $region68: #{critic_forward.1} parent=1 // pred_region
      %81 = dma.done [#allocation5], 9600
    $region69: #{critic_forward.1} parent=1 // pred_fallthru
      _
    // Predicated region
    $region70: #{critic_forward.1} parent=1 // pred_check
      _
    $region71: #{critic_forward.1} parent=1 // pred_check_branch
      %83 = sbr.rel (0) target = $region73
    $region72: #{critic_forward.1} parent=1 // pred_region
      %84 = dma.done [#allocation7], 9600
    $region73: #{critic_forward.1} parent=1 // pred_fallthru
      _
    %v85 = vld [vmem:[%s0] sm:$0x3]
    %v86 = vld [vmem:[%s1] sm:$0x3]
    %v87 = vld [vmem:[%s2] sm:$0xff]
    %v88 = vld [vmem:[%s2 + $0x8] sm:$0xff]
    %v89 = vunpack.c.l.bf16 %v87
    %v90 = vunpack.c.h.bf16 %v87
    %v91 = vunpack.c.l.bf16 %v88
    %v92 = vunpack.c.h.bf16 %v88
    %v93 = vld [vmem:[%s3] sm:$0xff]
    %v94 = vunpack.c.l.bf16 %v93
    %v95 = vunpack.c.h.bf16 %v93
    %v98 = vcombine.high %v94, %v94
    %v99 = vcombine.high %v95, %v95
    %vm100 = vcmask 31744
    %v102 = vsel %vm100, %v86, 0
    %vm104 = vcmask 1043456
    %v105 = vsel %vm104, %v94, 0
    %v107 = vsel %vm104, %v98, 0
    %v109 = vsel %vm104, %v95, 0
    %v111 = vsel %vm104, %v99, 0
    %113 = vmatprep.subr.mxu0 %v107
    %114 = vmatpush1.msra.mxu0 %v105
    %115 = vmatprep.subr.mxu0 0.0
    %116 = vmatpush1.msra.mxu0 0.0
    %117 = vmatprep.subr.mxu0 0.0
    %118 = vmatpush1.msra.mxu0 0.0
    %119 = vmatprep.subr.mxu0 0.0
    %120 = vmatpush1.msra.mxu0 0.0
    %121 = vmatprep.subr.mxu0 0.0
    %122 = vmatpush1.msra.mxu0 0.0
    %123 = vmatprep.subr.mxu0 0.0
    %124 = vmatpush1.msra.mxu0 0.0
    %125 = vmatprep.subr.mxu0 0.0
    %126 = vmatpush1.msra.mxu0 0.0
    %127 = vmatprep.subr.mxu0 0.0
    %128 = vmatpush1.msra.mxu0 0.0
    %129 = vmatprep.subr.mxu0 0.0
    %130 = vmatpush1.msra.mxu0 0.0
    %131 = vmatprep.subr.mxu0 0.0
    %132 = vmatpush1.msra.mxu0 0.0
    %133 = vmatprep.subr.mxu0 0.0
    %134 = vmatpush1.msra.mxu0 0.0
    %135 = vmatprep.subr.mxu0 0.0
    %136 = vmatpush1.msra.mxu0 0.0
    %137 = vmatprep.subr.mxu0 0.0
    %138 = vmatpush1.msra.mxu0 0.0
    %139 = vmatprep.subr.mxu0 0.0
    %140 = vmatpush1.msra.mxu0 0.0
    %141 = vmatprep.subr.mxu0 0.0
    %142 = vmatpush1.msra.mxu0 0.0
    %143 = vmatprep.subr.mxu0 0.0
    %144 = vmatpush1.msra.mxu0 0.0
    %145 = vmatprep.subr.mxu0 0.0
    %146 = vmatpush1.msra.mxu0 0.0
    %147 = vmatprep.subr.mxu0 0.0
    %148 = vmatpush1.msra.mxu0 0.0
    %149 = vmatprep.subr.mxu0 0.0
    %150 = vmatpush1.msra.mxu0 0.0
    %151 = vmatprep.subr.mxu0 0.0
    %152 = vmatpush1.msra.mxu0 0.0
    %153 = vmatprep.subr.mxu0 0.0
    %154 = vmatpush1.msra.mxu0 0.0
    %155 = vmatprep.subr.mxu0 0.0
    %156 = vmatpush1.msra.mxu0 0.0
    %157 = vmatprep.subr.mxu0 0.0
    %158 = vmatpush1.msra.mxu0 0.0
    %159 = vmatprep.subr.mxu0 0.0
    %160 = vmatpush1.msra.mxu0 0.0
    %161 = vmatprep.subr.mxu0 0.0
    %162 = vmatpush1.msra.mxu0 0.0
    %163 = vmatprep.subr.mxu0 0.0
    %164 = vmatpush1.msra.mxu0 0.0
    %165 = vmatprep.subr.mxu0 0.0
    %166 = vmatpush1.msra.mxu0 0.0
    %167 = vmatprep.subr.mxu0 0.0
    %168 = vmatpush1.msra.mxu0 0.0
    %169 = vmatprep.subr.mxu0 0.0
    %170 = vmatpush1.msra.mxu0 0.0
    %171 = vmatprep.subr.mxu0 0.0
    %172 = vmatpush1.msra.mxu0 0.0
    %173 = vmatprep.subr.mxu0 0.0
    %174 = vmatpush1.msra.mxu0 0.0
    %175 = vmatprep.subr.mxu0 0.0
    %176 = vmatpush1.msra.mxu0 0.0
    %177 = vmatprep.mubr.f32.mxu0 0.0
    %178 = vmatmul.mubr.f32.gmra.mrb[0].mxu0 %v102
    %v179 = vpop.f32.mrb[0].mxu0
    %v180 = vadd.f32 0.0, %v179
    %v181 = vpop.f32.mrb[0].mxu0
    %v182 = vadd.f32 0.0, %v181
    %183 = vdwg.mxu0
    %184 = vmatprep.subr.mxu0 %v111
    %185 = vmatpush1.msra.mxu0 %v109
    %186 = vmatprep.subr.mxu0 0.0
    %187 = vmatpush1.msra.mxu0 0.0
    %188 = vmatprep.subr.mxu0 0.0
    %189 = vmatpush1.msra.mxu0 0.0
    %190 = vmatprep.subr.mxu0 0.0
    %191 = vmatpush1.msra.mxu0 0.0
    %192 = vmatprep.subr.mxu0 0.0
    %193 = vmatpush1.msra.mxu0 0.0
    %194 = vmatprep.subr.mxu0 0.0
    %195 = vmatpush1.msra.mxu0 0.0
    %196 = vmatprep.subr.mxu0 0.0
    %197 = vmatpush1.msra.mxu0 0.0
    %198 = vmatprep.subr.mxu0 0.0
    %199 = vmatpush1.msra.mxu0 0.0
    %200 = vmatprep.subr.mxu0 0.0
    %201 = vmatpush1.msra.mxu0 0.0
    %202 = vmatprep.subr.mxu0 0.0
    %203 = vmatpush1.msra.mxu0 0.0
    %204 = vmatprep.subr.mxu0 0.0
    %205 = vmatpush1.msra.mxu0 0.0
    %206 = vmatprep.subr.mxu0 0.0
    %207 = vmatpush1.msra.mxu0 0.0
    %208 = vmatprep.subr.mxu0 0.0
    %209 = vmatpush1.msra.mxu0 0.0
    %210 = vmatprep.subr.mxu0 0.0
    %211 = vmatpush1.msra.mxu0 0.0
    %212 = vmatprep.subr.mxu0 0.0
    %213 = vmatpush1.msra.mxu0 0.0
    %214 = vmatprep.subr.mxu0 0.0
    %215 = vmatpush1.msra.mxu0 0.0
    %216 = vmatprep.subr.mxu0 0.0
    %217 = vmatpush1.msra.mxu0 0.0
    %218 = vmatprep.subr.mxu0 0.0
    %219 = vmatpush1.msra.mxu0 0.0
    %220 = vmatprep.subr.mxu0 0.0
    %221 = vmatpush1.msra.mxu0 0.0
    %222 = vmatprep.subr.mxu0 0.0
    %223 = vmatpush1.msra.mxu0 0.0
    %224 = vmatprep.subr.mxu0 0.0
    %225 = vmatpush1.msra.mxu0 0.0
    %226 = vmatprep.subr.mxu0 0.0
    %227 = vmatpush1.msra.mxu0 0.0
    %228 = vmatprep.subr.mxu0 0.0
    %229 = vmatpush1.msra.mxu0 0.0
    %230 = vmatprep.subr.mxu0 0.0
    %231 = vmatpush1.msra.mxu0 0.0
    %232 = vmatprep.subr.mxu0 0.0
    %233 = vmatpush1.msra.mxu0 0.0
    %234 = vmatprep.subr.mxu0 0.0
    %235 = vmatpush1.msra.mxu0 0.0
    %236 = vmatprep.subr.mxu0 0.0
    %237 = vmatpush1.msra.mxu0 0.0
    %238 = vmatprep.subr.mxu0 0.0
    %239 = vmatpush1.msra.mxu0 0.0
    %240 = vmatprep.subr.mxu0 0.0
    %241 = vmatpush1.msra.mxu0 0.0
    %242 = vmatprep.subr.mxu0 0.0
    %243 = vmatpush1.msra.mxu0 0.0
    %244 = vmatprep.subr.mxu0 0.0
    %245 = vmatpush1.msra.mxu0 0.0
    %246 = vmatprep.subr.mxu0 0.0
    %247 = vmatpush1.msra.mxu0 0.0
    %248 = vmatprep.mubr.f32.mxu0 0.0
    %249 = vmatmul.mubr.f32.gmra.mrb[0].mxu0 %v102
    %v250 = vpop.f32.mrb[0].mxu0
    %v251 = vadd.f32 0.0, %v250
    %v252 = vpop.f32.mrb[0].mxu0
    %v253 = vadd.f32 0.0, %v252
    %254 = vdwg.mxu0
    %vm255 = vcmask 64512
    %v257 = vsel %vm255, %v85, 0
    %259 = vmatprep.subr.mxu0 %v90
    %260 = vmatpush1.msra.mxu0 %v89
    %261 = vmatprep.subr.mxu0 0.0
    %262 = vmatpush1.msra.mxu0 0.0
    %263 = vmatprep.subr.mxu0 0.0
    %264 = vmatpush1.msra.mxu0 0.0
    %265 = vmatprep.subr.mxu0 0.0
    %266 = vmatpush1.msra.mxu0 0.0
    %267 = vmatprep.subr.mxu0 0.0
    %268 = vmatpush1.msra.mxu0 0.0
    %269 = vmatprep.subr.mxu0 0.0
    %270 = vmatpush1.msra.mxu0 0.0
    %271 = vmatprep.subr.mxu0 0.0
    %272 = vmatpush1.msra.mxu0 0.0
    %273 = vmatprep.subr.mxu0 0.0
    %274 = vmatpush1.msra.mxu0 0.0
    %275 = vmatprep.subr.mxu0 0.0
    %276 = vmatpush1.msra.mxu0 0.0
    %277 = vmatprep.subr.mxu0 0.0
    %278 = vmatpush1.msra.mxu0 0.0
    %279 = vmatprep.subr.mxu0 0.0
    %280 = vmatpush1.msra.mxu0 0.0
    %281 = vmatprep.subr.mxu0 0.0
    %282 = vmatpush1.msra.mxu0 0.0
    %283 = vmatprep.subr.mxu0 0.0
    %284 = vmatpush1.msra.mxu0 0.0
    %285 = vmatprep.subr.mxu0 0.0
    %286 = vmatpush1.msra.mxu0 0.0
    %287 = vmatprep.subr.mxu0 0.0
    %288 = vmatpush1.msra.mxu0 0.0
    %289 = vmatprep.subr.mxu0 0.0
    %290 = vmatpush1.msra.mxu0 0.0
    %291 = vmatprep.subr.mxu0 0.0
    %292 = vmatpush1.msra.mxu0 0.0
    %293 = vmatprep.subr.mxu0 0.0
    %294 = vmatpush1.msra.mxu0 0.0
    %295 = vmatprep.subr.mxu0 0.0
    %296 = vmatpush1.msra.mxu0 0.0
    %297 = vmatprep.subr.mxu0 0.0
    %298 = vmatpush1.msra.mxu0 0.0
    %299 = vmatprep.subr.mxu0 0.0
    %300 = vmatpush1.msra.mxu0 0.0
    %301 = vmatprep.subr.mxu0 0.0
    %302 = vmatpush1.msra.mxu0 0.0
    %303 = vmatprep.subr.mxu0 0.0
    %304 = vmatpush1.msra.mxu0 0.0
    %305 = vmatprep.subr.mxu0 0.0
    %306 = vmatpush1.msra.mxu0 0.0
    %307 = vmatprep.subr.mxu0 0.0
    %308 = vmatpush1.msra.mxu0 0.0
    %309 = vmatprep.subr.mxu0 0.0
    %310 = vmatpush1.msra.mxu0 0.0
    %311 = vmatprep.subr.mxu0 0.0
    %312 = vmatpush1.msra.mxu0 0.0
    %313 = vmatprep.subr.mxu0 0.0
    %314 = vmatpush1.msra.mxu0 0.0
    %315 = vmatprep.subr.mxu0 0.0
    %316 = vmatpush1.msra.mxu0 0.0
    %317 = vmatprep.subr.mxu0 0.0
    %318 = vmatpush1.msra.mxu0 0.0
    %319 = vmatprep.subr.mxu0 0.0
    %320 = vmatpush1.msra.mxu0 0.0
    %321 = vmatprep.subr.mxu0 0.0
    %322 = vmatpush1.msra.mxu0 0.0
    %323 = vmatprep.mubr.f32.mxu0 0.0
    %324 = vmatmul.mubr.f32.gmra.mrb[0].mxu0 %v257
    %v325 = vpop.f32.mrb[0].mxu0
    %v326 = vadd.f32 %v180, %v325
    %v327 = vpop.f32.mrb[0].mxu0
    %v328 = vadd.f32 %v182, %v327
    %329 = vdwg.mxu0
    %330 = vmatprep.subr.mxu0 %v92
    %331 = vmatpush1.msra.mxu0 %v91
    %332 = vmatprep.subr.mxu0 0.0
    %333 = vmatpush1.msra.mxu0 0.0
    %334 = vmatprep.subr.mxu0 0.0
    %335 = vmatpush1.msra.mxu0 0.0
    %336 = vmatprep.subr.mxu0 0.0
    %337 = vmatpush1.msra.mxu0 0.0
    %338 = vmatprep.subr.mxu0 0.0
    %339 = vmatpush1.msra.mxu0 0.0
    %340 = vmatprep.subr.mxu0 0.0
    %341 = vmatpush1.msra.mxu0 0.0
    %342 = vmatprep.subr.mxu0 0.0
    %343 = vmatpush1.msra.mxu0 0.0
    %344 = vmatprep.subr.mxu0 0.0
    %345 = vmatpush1.msra.mxu0 0.0
    %346 = vmatprep.subr.mxu0 0.0
    %347 = vmatpush1.msra.mxu0 0.0
    %348 = vmatprep.subr.mxu0 0.0
    %349 = vmatpush1.msra.mxu0 0.0
    %350 = vmatprep.subr.mxu0 0.0
    %351 = vmatpush1.msra.mxu0 0.0
    %352 = vmatprep.subr.mxu0 0.0
    %353 = vmatpush1.msra.mxu0 0.0
    %354 = vmatprep.subr.mxu0 0.0
    %355 = vmatpush1.msra.mxu0 0.0
    %356 = vmatprep.subr.mxu0 0.0
    %357 = vmatpush1.msra.mxu0 0.0
    %358 = vmatprep.subr.mxu0 0.0
    %359 = vmatpush1.msra.mxu0 0.0
    %360 = vmatprep.subr.mxu0 0.0
    %361 = vmatpush1.msra.mxu0 0.0
    %362 = vmatprep.subr.mxu0 0.0
    %363 = vmatpush1.msra.mxu0 0.0
    %364 = vmatprep.subr.mxu0 0.0
    %365 = vmatpush1.msra.mxu0 0.0
    %366 = vmatprep.subr.mxu0 0.0
    %367 = vmatpush1.msra.mxu0 0.0
    %368 = vmatprep.subr.mxu0 0.0
    %369 = vmatpush1.msra.mxu0 0.0
    %370 = vmatprep.subr.mxu0 0.0
    %371 = vmatpush1.msra.mxu0 0.0
    %372 = vmatprep.subr.mxu0 0.0
    %373 = vmatpush1.msra.mxu0 0.0
    %374 = vmatprep.subr.mxu0 0.0
    %375 = vmatpush1.msra.mxu0 0.0
    %376 = vmatprep.subr.mxu0 0.0
    %377 = vmatpush1.msra.mxu0 0.0
    %378 = vmatprep.subr.mxu0 0.0
    %379 = vmatpush1.msra.mxu0 0.0
    %380 = vmatprep.subr.mxu0 0.0
    %381 = vmatpush1.msra.mxu0 0.0
    %382 = vmatprep.subr.mxu0 0.0
    %383 = vmatpush1.msra.mxu0 0.0
    %384 = vmatprep.subr.mxu0 0.0
    %385 = vmatpush1.msra.mxu0 0.0
    %386 = vmatprep.subr.mxu0 0.0
    %387 = vmatpush1.msra.mxu0 0.0
    %388 = vmatprep.subr.mxu0 0.0
    %389 = vmatpush1.msra.mxu0 0.0
    %390 = vmatprep.subr.mxu0 0.0
    %391 = vmatpush1.msra.mxu0 0.0
    %392 = vmatprep.subr.mxu0 0.0
    %393 = vmatpush1.msra.mxu0 0.0
    %394 = vmatprep.mubr.f32.mxu0 0.0
    %395 = vmatmul.mubr.f32.gmra.mrb[0].mxu0 %v257
    %v396 = vpop.f32.mrb[0].mxu0
    %v397 = vadd.f32 %v251, %v396
    %v398 = vpop.f32.mrb[0].mxu0
    %v399 = vadd.f32 %v253, %v398
    %400 = vdwg.mxu0
    %v401 = vld [vmem:[%s4] sm:$0xf]
    %v403 = vlaneseq
    %v404 = vshrl.u32 %v403, 7
    %v405 = vsub.s32 0, %v404
    %v406 = vrot.slane %v401, %v405
    %v407 = vlaneseq
    %v408 = vshrl.u32 %v407, 7
    %v409 = vsub.s32 1, %v408
    %v410 = vrot.slane %v401, %v409
    %v411 = vlaneseq
    %v412 = vshrl.u32 %v411, 7
    %v413 = vsub.s32 2, %v412
    %v414 = vrot.slane %v401, %v413
    %v415 = vlaneseq
    %v416 = vshrl.u32 %v415, 7
    %v417 = vsub.s32 3, %v416
    %v418 = vrot.slane %v401, %v417
    %v423 = vadd.f32 %v326, %v406
    %v424 = vadd.f32 %v328, %v410
    %v425 = vadd.f32 %v397, %v414
    %v426 = vadd.f32 %v399, %v418
    %v427 = vmax.f32 %v423, 0.0
    %v428 = vmax.f32 %v424, 0.0
    %v429 = vmax.f32 %v425, 0.0
    %v430 = vmax.f32 %v426, 0.0
    %v431 = vld [vmem:[#allocation4] sm:$0xff]
    %v432 = vld [vmem:[#allocation4 + $0x8] sm:$0xf]
    %v433 = vld [vmem:[#allocation4 + $0xc] sm:$0xff]
    %v434 = vld [vmem:[#allocation4 + $0x14] sm:$0xf]
    %v435 = vld [vmem:[#allocation4 + $0x18] sm:$0xff]
    %v436 = vld [vmem:[#allocation4 + $0x20] sm:$0xf]
    %v437 = vld [vmem:[#allocation4 + $0x24] sm:$0xff]
    %v438 = vld [vmem:[#allocation4 + $0x2c] sm:$0xf]
    %v439 = vld [vmem:[#allocation4 + $0x30] sm:$0xff]
    %v440 = vld [vmem:[#allocation4 + $0x38] sm:$0xf]
    %v441 = vld [vmem:[#allocation4 + $0x3c] sm:$0xff]
    %v442 = vld [vmem:[#allocation4 + $0x44] sm:$0xf]
    %v443 = vld [vmem:[#allocation4 + $0x48] sm:$0xff]
    %v444 = vld [vmem:[#allocation4 + $0x50] sm:$0xf]
    %v445 = vld [vmem:[#allocation4 + $0x54] sm:$0xff]
    %v446 = vld [vmem:[#allocation4 + $0x5c] sm:$0xf]
    %v447 = vld [vmem:[#allocation4 + $0x60] sm:$0xff]
    %v448 = vld [vmem:[#allocation4 + $0x68] sm:$0xf]
    %v449 = vld [vmem:[#allocation4 + $0x6c] sm:$0xff]
    %v450 = vld [vmem:[#allocation4 + $0x74] sm:$0xf]
    %v451 = vld [vmem:[#allocation4 + $0x78] sm:$0xff]
    %v452 = vld [vmem:[#allocation4 + $0x80] sm:$0xf]
    %v453 = vld [vmem:[#allocation4 + $0x84] sm:$0xff]
    %v454 = vld [vmem:[#allocation4 + $0x8c] sm:$0xf]
    %v455 = vld [vmem:[#allocation4 + $0x90] sm:$0xff]
    %v456 = vld [vmem:[#allocation4 + $0x98] sm:$0xf]
    %v457 = vld [vmem:[#allocation4 + $0x9c] sm:$0xff]
    %v458 = vld [vmem:[#allocation4 + $0xa4] sm:$0xf]
    %v459 = vld [vmem:[#allocation4 + $0xa8] sm:$0xff]
    %v460 = vld [vmem:[#allocation4 + $0xb0] sm:$0xf]
    %v461 = vld [vmem:[#allocation4 + $0xb4] sm:$0xff]
    %v462 = vld [vmem:[#allocation4 + $0xbc] sm:$0xf]
    %v463 = vld [vmem:[#allocation4 + $0xc0] sm:$0xff]
    %v464 = vld [vmem:[#allocation4 + $0xc8] sm:$0xf]
    %v465 = vld [vmem:[#allocation4 + $0xcc] sm:$0xff]
    %v466 = vld [vmem:[#allocation4 + $0xd4] sm:$0xf]
    %v467 = vld [vmem:[#allocation4 + $0xd8] sm:$0xff]
    %v468 = vld [vmem:[#allocation4 + $0xe0] sm:$0xf]
    %v469 = vld [vmem:[#allocation4 + $0xe4] sm:$0xff]
    %v470 = vld [vmem:[#allocation4 + $0xec] sm:$0xf]
    %v471 = vld [vmem:[#allocation4 + $0xf0] sm:$0xff]
    %v472 = vld [vmem:[#allocation4 + $0xf8] sm:$0xf]
    %v473 = vld [vmem:[#allocation4 + $0xfc] sm:$0xff]
    %v474 = vld [vmem:[#allocation4 + $0x104] sm:$0xf]
    %v475 = vld [vmem:[#allocation4 + $0x108] sm:$0xff]
    %v476 = vld [vmem:[#allocation4 + $0x110] sm:$0xf]
    %v477 = vld [vmem:[#allocation4 + $0x114] sm:$0xff]
    %v478 = vld [vmem:[#allocation4 + $0x11c] sm:$0xf]
    %v479 = vld [vmem:[#allocation4 + $0x120] sm:$0xff]
    %v480 = vld [vmem:[#allocation4 + $0x128] sm:$0xf]
    %v481 = vld [vmem:[#allocation4 + $0x12c] sm:$0xff]
    %v482 = vld [vmem:[#allocation4 + $0x134] sm:$0xf]
    %v483 = vld [vmem:[#allocation4 + $0x138] sm:$0xff]
    %v484 = vld [vmem:[#allocation4 + $0x140] sm:$0xf]
    %v485 = vld [vmem:[#allocation4 + $0x144] sm:$0xff]
    %v486 = vld [vmem:[#allocation4 + $0x14c] sm:$0xf]
    %v487 = vld [vmem:[#allocation4 + $0x150] sm:$0xff]
    %v488 = vld [vmem:[#allocation4 + $0x158] sm:$0xf]
    %v489 = vld [vmem:[#allocation4 + $0x15c] sm:$0xff]
    %v490 = vld [vmem:[#allocation4 + $0x164] sm:$0xf]
    %v491 = vld [vmem:[#allocation4 + $0x168] sm:$0xff]
    %v492 = vld [vmem:[#allocation4 + $0x170] sm:$0xf]
    %v493 = vld [vmem:[#allocation4 + $0x174] sm:$0xff]
    %v494 = vld [vmem:[#allocation4 + $0x17c] sm:$0xf]
    %v495 = vld [vmem:[#allocation4 + $0x180] sm:$0xff]
    %v496 = vld [vmem:[#allocation4 + $0x188] sm:$0xf]
    %v497 = vld [vmem:[#allocation4 + $0x18c] sm:$0xff]
    %v498 = vld [vmem:[#allocation4 + $0x194] sm:$0xf]
    %v499 = vld [vmem:[#allocation4 + $0x198] sm:$0xff]
    %v500 = vld [vmem:[#allocation4 + $0x1a0] sm:$0xf]
    %v501 = vld [vmem:[#allocation4 + $0x1a4] sm:$0xff]
    %v502 = vld [vmem:[#allocation4 + $0x1ac] sm:$0xf]
    %v503 = vld [vmem:[#allocation4 + $0x1b0] sm:$0xff]
    %v504 = vld [vmem:[#allocation4 + $0x1b8] sm:$0xf]
    %v505 = vld [vmem:[#allocation4 + $0x1bc] sm:$0xff]
    %v506 = vld [vmem:[#allocation4 + $0x1c4] sm:$0xf]
    %v507 = vld [vmem:[#allocation4 + $0x1c8] sm:$0xff]
    %v508 = vld [vmem:[#allocation4 + $0x1d0] sm:$0xf]
    %v509 = vld [vmem:[#allocation4 + $0x1d4] sm:$0xff]
    %v510 = vld [vmem:[#allocation4 + $0x1dc] sm:$0xf]
    %v511 = vld [vmem:[#allocation4 + $0x1e0] sm:$0xff]
    %v512 = vld [vmem:[#allocation4 + $0x1e8] sm:$0xf]
    %v513 = vld [vmem:[#allocation4 + $0x1ec] sm:$0xff]
    %v514 = vld [vmem:[#allocation4 + $0x1f4] sm:$0xf]
    %v515 = vld [vmem:[#allocation4 + $0x1f8] sm:$0xff]
    %v516 = vld [vmem:[#allocation4 + $0x200] sm:$0xf]
    %v517 = vld [vmem:[#allocation4 + $0x204] sm:$0xff]
    %v518 = vld [vmem:[#allocation4 + $0x20c] sm:$0xf]
    %v519 = vld [vmem:[#allocation4 + $0x210] sm:$0xff]
    %v520 = vld [vmem:[#allocation4 + $0x218] sm:$0xf]
    %v521 = vld [vmem:[#allocation4 + $0x21c] sm:$0xff]
    %v522 = vld [vmem:[#allocation4 + $0x224] sm:$0xf]
    %v523 = vld [vmem:[#allocation4 + $0x228] sm:$0xff]
    %v524 = vld [vmem:[#allocation4 + $0x230] sm:$0xf]
    %v525 = vld [vmem:[#allocation4 + $0x234] sm:$0xff]
    %v526 = vld [vmem:[#allocation4 + $0x23c] sm:$0xf]
    %v527 = vld [vmem:[#allocation4 + $0x240] sm:$0xff]
    %v528 = vld [vmem:[#allocation4 + $0x248] sm:$0xf]
    %v529 = vld [vmem:[#allocation4 + $0x24c] sm:$0xff]
    %v530 = vld [vmem:[#allocation4 + $0x254] sm:$0xf]
    %v531 = vunpack.c.l.bf16 %v431
    %v532 = vunpack.c.h.bf16 %v431
    %v533 = vunpack.c.l.bf16 %v432
    %v534 = vunpack.c.l.bf16 %v433
    %v535 = vunpack.c.h.bf16 %v433
    %v536 = vunpack.c.l.bf16 %v434
    %v537 = vunpack.c.l.bf16 %v435
    %v538 = vunpack.c.h.bf16 %v435
    %v539 = vunpack.c.l.bf16 %v436
    %v540 = vunpack.c.l.bf16 %v437
    %v541 = vunpack.c.h.bf16 %v437
    %v542 = vunpack.c.l.bf16 %v438
    %v543 = vunpack.c.l.bf16 %v439
    %v544 = vunpack.c.h.bf16 %v439
    %v545 = vunpack.c.l.bf16 %v440
    %v546 = vunpack.c.l.bf16 %v441
    %v547 = vunpack.c.h.bf16 %v441
    %v548 = vunpack.c.l.bf16 %v442
    %v549 = vunpack.c.l.bf16 %v443
    %v550 = vunpack.c.h.bf16 %v443
    %v551 = vunpack.c.l.bf16 %v444
    %v552 = vunpack.c.l.bf16 %v445
    %v553 = vunpack.c.h.bf16 %v445
    %v554 = vunpack.c.l.bf16 %v446
    %v555 = vunpack.c.l.bf16 %v447
    %v556 = vunpack.c.h.bf16 %v447
    %v557 = vunpack.c.l.bf16 %v448
    %v558 = vunpack.c.l.bf16 %v449
    %v559 = vunpack.c.h.bf16 %v449
    %v560 = vunpack.c.l.bf16 %v450
    %v561 = vunpack.c.l.bf16 %v451
    %v562 = vunpack.c.h.bf16 %v451
    %v563 = vunpack.c.l.bf16 %v452
    %v564 = vunpack.c.l.bf16 %v453
    %v565 = vunpack.c.h.bf16 %v453
    %v566 = vunpack.c.l.bf16 %v454
    %v567 = vunpack.c.l.bf16 %v455
    %v568 = vunpack.c.h.bf16 %v455
    %v569 = vunpack.c.l.bf16 %v456
    %v570 = vunpack.c.l.bf16 %v457
    %v571 = vunpack.c.h.bf16 %v457
    %v572 = vunpack.c.l.bf16 %v458
    %v573 = vunpack.c.l.bf16 %v459
    %v574 = vunpack.c.h.bf16 %v459
    %v575 = vunpack.c.l.bf16 %v460
    %v576 = vunpack.c.l.bf16 %v461
    %v577 = vunpack.c.h.bf16 %v461
    %v578 = vunpack.c.l.bf16 %v462
    %v579 = vunpack.c.l.bf16 %v463
    %v580 = vunpack.c.h.bf16 %v463
    %v581 = vunpack.c.l.bf16 %v464
    %v582 = vunpack.c.l.bf16 %v465
    %v583 = vunpack.c.h.bf16 %v465
    %v584 = vunpack.c.l.bf16 %v466
    %v585 = vunpack.c.l.bf16 %v467
    %v586 = vunpack.c.h.bf16 %v467
    %v587 = vunpack.c.l.bf16 %v468
    %v588 = vunpack.c.l.bf16 %v469
    %v589 = vunpack.c.h.bf16 %v469
    %v590 = vunpack.c.l.bf16 %v470
    %v591 = vunpack.c.l.bf16 %v471
    %v592 = vunpack.c.h.bf16 %v471
    %v593 = vunpack.c.l.bf16 %v472
    %v594 = vunpack.c.l.bf16 %v473
    %v595 = vunpack.c.h.bf16 %v473
    %v596 = vunpack.c.l.bf16 %v474
    %v597 = vunpack.c.l.bf16 %v475
    %v598 = vunpack.c.h.bf16 %v475
    %v599 = vunpack.c.l.bf16 %v476
    %v600 = vunpack.c.l.bf16 %v477
    %v601 = vunpack.c.h.bf16 %v477
    %v602 = vunpack.c.l.bf16 %v478
    %v603 = vunpack.c.l.bf16 %v479
    %v604 = vunpack.c.h.bf16 %v479
    %v605 = vunpack.c.l.bf16 %v480
    %v606 = vunpack.c.l.bf16 %v481
    %v607 = vunpack.c.h.bf16 %v481
    %v608 = vunpack.c.l.bf16 %v482
    %v609 = vunpack.c.l.bf16 %v483
    %v610 = vunpack.c.h.bf16 %v483
    %v611 = vunpack.c.l.bf16 %v484
    %v612 = vunpack.c.l.bf16 %v485
    %v613 = vunpack.c.h.bf16 %v485
    %v614 = vunpack.c.l.bf16 %v486
    %v615 = vunpack.c.l.bf16 %v487
    %v616 = vunpack.c.h.bf16 %v487
    %v617 = vunpack.c.l.bf16 %v488
    %v618 = vunpack.c.l.bf16 %v489
    %v619 = vunpack.c.h.bf16 %v489
    %v620 = vunpack.c.l.bf16 %v490
    %v621 = vunpack.c.l.bf16 %v491
    %v622 = vunpack.c.h.bf16 %v491
    %v623 = vunpack.c.l.bf16 %v492
    %v624 = vunpack.c.l.bf16 %v493
    %v625 = vunpack.c.h.bf16 %v493
    %v626 = vunpack.c.l.bf16 %v494
    %v627 = vunpack.c.l.bf16 %v495
    %v628 = vunpack.c.h.bf16 %v495
    %v629 = vunpack.c.l.bf16 %v496
    %v630 = vunpack.c.l.bf16 %v497
    %v631 = vunpack.c.h.bf16 %v497
    %v632 = vunpack.c.l.bf16 %v498
    %v633 = vunpack.c.l.bf16 %v499
    %v634 = vunpack.c.h.bf16 %v499
    %v635 = vunpack.c.l.bf16 %v500
    %v636 = vunpack.c.l.bf16 %v501
    %v637 = vunpack.c.h.bf16 %v501
    %v638 = vunpack.c.l.bf16 %v502
    %v639 = vunpack.c.l.bf16 %v503
    %v640 = vunpack.c.h.bf16 %v503
    %v641 = vunpack.c.l.bf16 %v504
    %v642 = vunpack.c.l.bf16 %v505
    %v643 = vunpack.c.h.bf16 %v505
    %v644 = vunpack.c.l.bf16 %v506
    %v645 = vunpack.c.l.bf16 %v507
    %v646 = vunpack.c.h.bf16 %v507
    %v647 = vunpack.c.l.bf16 %v508
    %v648 = vunpack.c.l.bf16 %v509
    %v649 = vunpack.c.h.bf16 %v509
    %v650 = vunpack.c.l.bf16 %v510
    %v651 = vunpack.c.l.bf16 %v511
    %v652 = vunpack.c.h.bf16 %v511
    %v653 = vunpack.c.l.bf16 %v512
    %v654 = vunpack.c.l.bf16 %v513
    %v655 = vunpack.c.h.bf16 %v513
    %v656 = vunpack.c.l.bf16 %v514
    %v657 = vunpack.c.l.bf16 %v515
    %v658 = vunpack.c.h.bf16 %v515
    %v659 = vunpack.c.l.bf16 %v516
    %v660 = vunpack.c.l.bf16 %v517
    %v661 = vunpack.c.h.bf16 %v517
    %v662 = vunpack.c.l.bf16 %v518
    %v663 = vunpack.c.l.bf16 %v519
    %v664 = vunpack.c.h.bf16 %v519
    %v665 = vunpack.c.l.bf16 %v520
    %v666 = vunpack.c.l.bf16 %v521
    %v667 = vunpack.c.h.bf16 %v521
    %v668 = vunpack.c.l.bf16 %v522
    %v669 = vunpack.c.l.bf16 %v523
    %v670 = vunpack.c.h.bf16 %v523
    %v671 = vunpack.c.l.bf16 %v524
    %v672 = vunpack.c.l.bf16 %v525
    %v673 = vunpack.c.h.bf16 %v525
    %v674 = vunpack.c.l.bf16 %v526
    %v675 = vunpack.c.l.bf16 %v527
    %v676 = vunpack.c.h.bf16 %v527
    %v677 = vunpack.c.l.bf16 %v528
    %v678 = vunpack.c.l.bf16 %v529
    %v679 = vunpack.c.h.bf16 %v529
    %v680 = vunpack.c.l.bf16 %v530
    %v681 = vld [vmem:[%s6] sm:$0x7]
    %v683 = vlaneseq
    %v684 = vshrl.u32 %v683, 7
    %v685 = vsub.s32 0, %v684
    %v686 = vrot.slane %v681, %v685
    %v687 = vlaneseq
    %v688 = vshrl.u32 %v687, 7
    %v689 = vsub.s32 1, %v688
    %v690 = vrot.slane %v681, %v689
    %v691 = vlaneseq
    %v692 = vshrl.u32 %v691, 7
    %v693 = vsub.s32 2, %v692
    %v694 = vrot.slane %v681, %v693
    %vm698 = vcmask 130048
    %v700 = vsel %vm698, %v430, 0
    %702 = vmatprep.subr.mxu0 %v532
    %703 = vmatpush1.msra.mxu0 %v531
    %704 = vmatprep.subr.mxu0 %v535
    %705 = vmatpush1.msra.mxu0 %v534
    %706 = vmatprep.subr.mxu0 %v538
    %707 = vmatpush1.msra.mxu0 %v537
    %708 = vmatprep.subr.mxu0 %v541
    %709 = vmatpush1.msra.mxu0 %v540
    %710 = vmatprep.subr.mxu0 %v544
    %711 = vmatpush1.msra.mxu0 %v543
    %712 = vmatprep.subr.mxu0 %v547
    %713 = vmatpush1.msra.mxu0 %v546
    %714 = vmatprep.subr.mxu0 %v550
    %715 = vmatpush1.msra.mxu0 %v549
    %716 = vmatprep.subr.mxu0 %v553
    %717 = vmatpush1.msra.mxu0 %v552
    %718 = vmatprep.subr.mxu0 %v556
    %719 = vmatpush1.msra.mxu0 %v555
    %720 = vmatprep.subr.mxu0 %v559
    %721 = vmatpush1.msra.mxu0 %v558
    %722 = vmatprep.subr.mxu0 %v562
    %723 = vmatpush1.msra.mxu0 %v561
    %724 = vmatprep.subr.mxu0 %v565
    %725 = vmatpush1.msra.mxu0 %v564
    %726 = vmatprep.subr.mxu0 %v568
    %727 = vmatpush1.msra.mxu0 %v567
    %728 = vmatprep.subr.mxu0 %v571
    %729 = vmatpush1.msra.mxu0 %v570
    %730 = vmatprep.subr.mxu0 %v574
    %731 = vmatpush1.msra.mxu0 %v573
    %732 = vmatprep.subr.mxu0 %v577
    %733 = vmatpush1.msra.mxu0 %v576
    %734 = vmatprep.subr.mxu0 %v580
    %735 = vmatpush1.msra.mxu0 %v579
    %736 = vmatprep.subr.mxu0 %v583
    %737 = vmatpush1.msra.mxu0 %v582
    %738 = vmatprep.subr.mxu0 %v586
    %739 = vmatpush1.msra.mxu0 %v585
    %740 = vmatprep.subr.mxu0 %v589
    %741 = vmatpush1.msra.mxu0 %v588
    %742 = vmatprep.subr.mxu0 %v592
    %743 = vmatpush1.msra.mxu0 %v591
    %744 = vmatprep.subr.mxu0 %v595
    %745 = vmatpush1.msra.mxu0 %v594
    %746 = vmatprep.subr.mxu0 %v598
    %747 = vmatpush1.msra.mxu0 %v597
    %748 = vmatprep.subr.mxu0 %v601
    %749 = vmatpush1.msra.mxu0 %v600
    %750 = vmatprep.subr.mxu0 %v604
    %751 = vmatpush1.msra.mxu0 %v603
    %752 = vmatprep.subr.mxu0 %v607
    %753 = vmatpush1.msra.mxu0 %v606
    %754 = vmatprep.subr.mxu0 %v610
    %755 = vmatpush1.msra.mxu0 %v609
    %756 = vmatprep.subr.mxu0 %v613
    %757 = vmatpush1.msra.mxu0 %v612
    %758 = vmatprep.subr.mxu0 %v616
    %759 = vmatpush1.msra.mxu0 %v615
    %760 = vmatprep.subr.mxu0 %v619
    %761 = vmatpush1.msra.mxu0 %v618
    %762 = vmatprep.subr.mxu0 %v622
    %763 = vmatpush1.msra.mxu0 %v621
    %764 = vmatprep.subr.mxu0 %v625
    %765 = vmatpush1.msra.mxu0 %v624
    %766 = vmatprep.mubr.f32.mxu0 %v428
    %767 = vmatmul.mubr.f32.gmra.mrb[0].mxu0 %v427
    %v768 = vpop.f32.mrb[0].mxu0
    %v769 = vadd.f32 %v686, %v768
    %v770 = vpop.f32.mrb[0].mxu0
    %v771 = vadd.f32 %v690, %v770
    %772 = vdwg.mxu0
    %773 = vmatprep.subr.mxu0 %v628
    %774 = vmatpush1.msra.mxu0 %v627
    %775 = vmatprep.subr.mxu0 %v631
    %776 = vmatpush1.msra.mxu0 %v630
    %777 = vmatprep.subr.mxu0 %v634
    %778 = vmatpush1.msra.mxu0 %v633
    %779 = vmatprep.subr.mxu0 %v637
    %780 = vmatpush1.msra.mxu0 %v636
    %781 = vmatprep.subr.mxu0 %v640
    %782 = vmatpush1.msra.mxu0 %v639
    %783 = vmatprep.subr.mxu0 %v643
    %784 = vmatpush1.msra.mxu0 %v642
    %785 = vmatprep.subr.mxu0 %v646
    %786 = vmatpush1.msra.mxu0 %v645
    %787 = vmatprep.subr.mxu0 %v649
    %788 = vmatpush1.msra.mxu0 %v648
    %789 = vmatprep.subr.mxu0 %v652
    %790 = vmatpush1.msra.mxu0 %v651
    %791 = vmatprep.subr.mxu0 %v655
    %792 = vmatpush1.msra.mxu0 %v654
    %793 = vmatprep.subr.mxu0 %v658
    %794 = vmatpush1.msra.mxu0 %v657
    %795 = vmatprep.subr.mxu0 %v661
    %796 = vmatpush1.msra.mxu0 %v660
    %797 = vmatprep.subr.mxu0 %v664
    %798 = vmatpush1.msra.mxu0 %v663
    %799 = vmatprep.subr.mxu0 %v667
    %800 = vmatpush1.msra.mxu0 %v666
    %801 = vmatprep.subr.mxu0 %v670
    %802 = vmatpush1.msra.mxu0 %v669
    %803 = vmatprep.subr.mxu0 %v673
    %804 = vmatpush1.msra.mxu0 %v672
    %805 = vmatprep.subr.mxu0 %v676
    %806 = vmatpush1.msra.mxu0 %v675
    %807 = vmatprep.subr.mxu0 %v679
    %808 = vmatpush1.msra.mxu0 %v678
    %809 = vmatprep.subr.mxu0 0.0
    %810 = vmatpush1.msra.mxu0 0.0
    %811 = vmatprep.subr.mxu0 0.0
    %812 = vmatpush1.msra.mxu0 0.0
    %813 = vmatprep.subr.mxu0 0.0
    %814 = vmatpush1.msra.mxu0 0.0
    %815 = vmatprep.subr.mxu0 0.0
    %816 = vmatpush1.msra.mxu0 0.0
    %817 = vmatprep.subr.mxu0 0.0
    %818 = vmatpush1.msra.mxu0 0.0
    %819 = vmatprep.subr.mxu0 0.0
    %820 = vmatpush1.msra.mxu0 0.0
    %821 = vmatprep.subr.mxu0 0.0
    %822 = vmatpush1.msra.mxu0 0.0
    %823 = vmatprep.subr.mxu0 0.0
    %824 = vmatpush1.msra.mxu0 0.0
    %825 = vmatprep.subr.mxu0 0.0
    %826 = vmatpush1.msra.mxu0 0.0
    %827 = vmatprep.subr.mxu0 0.0
    %828 = vmatpush1.msra.mxu0 0.0
    %829 = vmatprep.subr.mxu0 0.0
    %830 = vmatpush1.msra.mxu0 0.0
    %831 = vmatprep.subr.mxu0 0.0
    %832 = vmatpush1.msra.mxu0 0.0
    %833 = vmatprep.subr.mxu0 0.0
    %834 = vmatpush1.msra.mxu0 0.0
    %835 = vmatprep.subr.mxu0 0.0
    %836 = vmatpush1.msra.mxu0 0.0
    %837 = vmatprep.mubr.f32.mxu0 %v700
    %838 = vmatmul.mubr.f32.gmra.mrb[0].mxu0 %v429
    %v839 = vpop.f32.mrb[0].mxu0
    %v840 = vadd.f32 %v769, %v839
    %v841 = vpop.f32.mrb[0].mxu0
    %v842 = vadd.f32 %v771, %v841
    %843 = vdwg.mxu0
    %844 = vmatprep.subr.mxu0 0.0
    %845 = vmatpush1.msra.mxu0 %v533
    %846 = vmatprep.subr.mxu0 0.0
    %847 = vmatpush1.msra.mxu0 %v536
    %848 = vmatprep.subr.mxu0 0.0
    %849 = vmatpush1.msra.mxu0 %v539
    %850 = vmatprep.subr.mxu0 0.0
    %851 = vmatpush1.msra.mxu0 %v542
    %852 = vmatprep.subr.mxu0 0.0
    %853 = vmatpush1.msra.mxu0 %v545
    %854 = vmatprep.subr.mxu0 0.0
    %855 = vmatpush1.msra.mxu0 %v548
    %856 = vmatprep.subr.mxu0 0.0
    %857 = vmatpush1.msra.mxu0 %v551
    %858 = vmatprep.subr.mxu0 0.0
    %859 = vmatpush1.msra.mxu0 %v554
    %860 = vmatprep.subr.mxu0 0.0
    %861 = vmatpush1.msra.mxu0 %v557
    %862 = vmatprep.subr.mxu0 0.0
    %863 = vmatpush1.msra.mxu0 %v560
    %864 = vmatprep.subr.mxu0 0.0
    %865 = vmatpush1.msra.mxu0 %v563
    %866 = vmatprep.subr.mxu0 0.0
    %867 = vmatpush1.msra.mxu0 %v566
    %868 = vmatprep.subr.mxu0 0.0
    %869 = vmatpush1.msra.mxu0 %v569
    %870 = vmatprep.subr.mxu0 0.0
    %871 = vmatpush1.msra.mxu0 %v572
    %872 = vmatprep.subr.mxu0 0.0
    %873 = vmatpush1.msra.mxu0 %v575
    %874 = vmatprep.subr.mxu0 0.0
    %875 = vmatpush1.msra.mxu0 %v578
    %876 = vmatprep.subr.mxu0 0.0
    %877 = vmatpush1.msra.mxu0 %v581
    %878 = vmatprep.subr.mxu0 0.0
    %879 = vmatpush1.msra.mxu0 %v584
    %880 = vmatprep.subr.mxu0 0.0
    %881 = vmatpush1.msra.mxu0 %v587
    %882 = vmatprep.subr.mxu0 0.0
    %883 = vmatpush1.msra.mxu0 %v590
    %884 = vmatprep.subr.mxu0 0.0
    %885 = vmatpush1.msra.mxu0 %v593
    %886 = vmatprep.subr.mxu0 0.0
    %887 = vmatpush1.msra.mxu0 %v596
    %888 = vmatprep.subr.mxu0 0.0
    %889 = vmatpush1.msra.mxu0 %v599
    %890 = vmatprep.subr.mxu0 0.0
    %891 = vmatpush1.msra.mxu0 %v602
    %892 = vmatprep.subr.mxu0 0.0
    %893 = vmatpush1.msra.mxu0 %v605
    %894 = vmatprep.subr.mxu0 0.0
    %895 = vmatpush1.msra.mxu0 %v608
    %896 = vmatprep.subr.mxu0 0.0
    %897 = vmatpush1.msra.mxu0 %v611
    %898 = vmatprep.subr.mxu0 0.0
    %899 = vmatpush1.msra.mxu0 %v614
    %900 = vmatprep.subr.mxu0 0.0
    %901 = vmatpush1.msra.mxu0 %v617
    %902 = vmatprep.subr.mxu0 0.0
    %903 = vmatpush1.msra.mxu0 %v620
    %904 = vmatprep.subr.mxu0 0.0
    %905 = vmatpush1.msra.mxu0 %v623
    %906 = vmatprep.subr.mxu0 0.0
    %907 = vmatpush1.msra.mxu0 %v626
    %908 = vmatprep.mubr.f32.mxu0 %v428
    %909 = vmatmul.mubr.f32.gmra.mrb[0].mxu0 %v427
    %v910 = vpop.f32.mrb[0].mxu0
    %v911 = vadd.f32 %v694, %v910
    %v912 = vpop.f32.mrb[0].mxu0
    %913 = vdwg.mxu0
    %914 = vmatprep.subr.mxu0 0.0
    %915 = vmatpush1.msra.mxu0 %v629
    %916 = vmatprep.subr.mxu0 0.0
    %917 = vmatpush1.msra.mxu0 %v632
    %918 = vmatprep.subr.mxu0 0.0
    %919 = vmatpush1.msra.mxu0 %v635
    %920 = vmatprep.subr.mxu0 0.0
    %921 = vmatpush1.msra.mxu0 %v638
    %922 = vmatprep.subr.mxu0 0.0
    %923 = vmatpush1.msra.mxu0 %v641
    %924 = vmatprep.subr.mxu0 0.0
    %925 = vmatpush1.msra.mxu0 %v644
    %926 = vmatprep.subr.mxu0 0.0
    %927 = vmatpush1.msra.mxu0 %v647
    %928 = vmatprep.subr.mxu0 0.0
    %929 = vmatpush1.msra.mxu0 %v650
    %930 = vmatprep.subr.mxu0 0.0
    %931 = vmatpush1.msra.mxu0 %v653
    %932 = vmatprep.subr.mxu0 0.0
    %933 = vmatpush1.msra.mxu0 %v656
    %934 = vmatprep.subr.mxu0 0.0
    %935 = vmatpush1.msra.mxu0 %v659
    %936 = vmatprep.subr.mxu0 0.0
    %937 = vmatpush1.msra.mxu0 %v662
    %938 = vmatprep.subr.mxu0 0.0
    %939 = vmatpush1.msra.mxu0 %v665
    %940 = vmatprep.subr.mxu0 0.0
    %941 = vmatpush1.msra.mxu0 %v668
    %942 = vmatprep.subr.mxu0 0.0
    %943 = vmatpush1.msra.mxu0 %v671
    %944 = vmatprep.subr.mxu0 0.0
    %945 = vmatpush1.msra.mxu0 %v674
    %946 = vmatprep.subr.mxu0 0.0
    %947 = vmatpush1.msra.mxu0 %v677
    %948 = vmatprep.subr.mxu0 0.0
    %949 = vmatpush1.msra.mxu0 %v680
    %950 = vmatprep.subr.mxu0 0.0
    %951 = vmatpush1.msra.mxu0 0.0
    %952 = vmatprep.subr.mxu0 0.0
    %953 = vmatpush1.msra.mxu0 0.0
    %954 = vmatprep.subr.mxu0 0.0
    %955 = vmatpush1.msra.mxu0 0.0
    %956 = vmatprep.subr.mxu0 0.0
    %957 = vmatpush1.msra.mxu0 0.0
    %958 = vmatprep.subr.mxu0 0.0
    %959 = vmatpush1.msra.mxu0 0.0
    %960 = vmatprep.subr.mxu0 0.0
    %961 = vmatpush1.msra.mxu0 0.0
    %962 = vmatprep.subr.mxu0 0.0
    %963 = vmatpush1.msra.mxu0 0.0
    %964 = vmatprep.subr.mxu0 0.0
    %965 = vmatpush1.msra.mxu0 0.0
    %966 = vmatprep.subr.mxu0 0.0
    %967 = vmatpush1.msra.mxu0 0.0
    %968 = vmatprep.subr.mxu0 0.0
    %969 = vmatpush1.msra.mxu0 0.0
    %970 = vmatprep.subr.mxu0 0.0
    %971 = vmatpush1.msra.mxu0 0.0
    %972 = vmatprep.subr.mxu0 0.0
    %973 = vmatpush1.msra.mxu0 0.0
    %974 = vmatprep.subr.mxu0 0.0
    %975 = vmatpush1.msra.mxu0 0.0
    %976 = vmatprep.subr.mxu0 0.0
    %977 = vmatpush1.msra.mxu0 0.0
    %978 = vmatprep.mubr.f32.mxu0 %v700
    %979 = vmatmul.mubr.f32.gmra.mrb[0].mxu0 %v429
    %v980 = vpop.f32.mrb[0].mxu0
    %v981 = vadd.f32 %v911, %v980
    %v982 = vpop.f32.mrb[0].mxu0
    %983 = vdwg.mxu0
    %v984 = vmax.f32 %v840, 0.0
    %v985 = vmax.f32 %v842, 0.0
    %v986 = vmax.f32 %v981, 0.0
    %v987 = vld [vmem:[%s7] sm:$0xf]
    %v988 = vld [vmem:[%s7 + $0x4] sm:$0xf]
    %v989 = vld [vmem:[%s7 + $0x8] sm:$0xf]
    %v990 = vld [vmem:[%s7 + $0xc] sm:$0xf]
    %v991 = vld [vmem:[%s7 + $0x10] sm:$0xf]
    %v992 = vld [vmem:[%s7 + $0x14] sm:$0xf]
    %v993 = vld [vmem:[%s7 + $0x18] sm:$0xf]
    %v994 = vld [vmem:[%s7 + $0x1c] sm:$0xf]
    %v995 = vld [vmem:[%s7 + $0x20] sm:$0xf]
    %v996 = vld [vmem:[%s7 + $0x24] sm:$0xf]
    %v997 = vld [vmem:[%s7 + $0x28] sm:$0xf]
    %v998 = vld [vmem:[%s7 + $0x2c] sm:$0xf]
    %v999 = vld [vmem:[%s7 + $0x30] sm:$0xf]
    %v1000 = vld [vmem:[%s7 + $0x34] sm:$0xf]
    %v1001 = vld [vmem:[%s7 + $0x38] sm:$0xf]
    %v1002 = vld [vmem:[%s7 + $0x3c] sm:$0xf]
    %v1003 = vld [vmem:[%s7 + $0x40] sm:$0xf]
    %v1004 = vld [vmem:[%s7 + $0x44] sm:$0xf]
    %v1005 = vld [vmem:[%s7 + $0x48] sm:$0xf]
    %v1006 = vld [vmem:[%s7 + $0x4c] sm:$0xf]
    %v1007 = vld [vmem:[%s7 + $0x50] sm:$0xf]
    %v1008 = vld [vmem:[%s7 + $0x54] sm:$0xf]
    %v1009 = vld [vmem:[%s7 + $0x58] sm:$0xf]
    %v1010 = vld [vmem:[%s7 + $0x5c] sm:$0xf]
    %v1011 = vld [vmem:[%s7 + $0x60] sm:$0xf]
    %v1012 = vld [vmem:[%s7 + $0x64] sm:$0xf]
    %v1013 = vld [vmem:[%s7 + $0x68] sm:$0xf]
    %v1014 = vld [vmem:[%s7 + $0x6c] sm:$0xf]
    %v1015 = vld [vmem:[%s7 + $0x70] sm:$0xf]
    %v1016 = vld [vmem:[%s7 + $0x74] sm:$0xf]
    %v1017 = vld [vmem:[%s7 + $0x78] sm:$0xf]
    %v1018 = vld [vmem:[%s7 + $0x7c] sm:$0xf]
    %v1019 = vld [vmem:[%s7 + $0x80] sm:$0xf]
    %v1020 = vld [vmem:[%s7 + $0x84] sm:$0xf]
    %v1021 = vld [vmem:[%s7 + $0x88] sm:$0xf]
    %v1022 = vld [vmem:[%s7 + $0x8c] sm:$0xf]
    %v1023 = vld [vmem:[%s7 + $0x90] sm:$0xf]
    %v1024 = vld [vmem:[%s7 + $0x94] sm:$0x3]
    %v1025 = vunpack.c.l.bf16 %v987
    %v1026 = vunpack.c.l.bf16 %v988
    %v1027 = vunpack.c.l.bf16 %v989
    %v1028 = vunpack.c.l.bf16 %v990
    %v1029 = vunpack.c.l.bf16 %v991
    %v1030 = vunpack.c.l.bf16 %v992
    %v1031 = vunpack.c.l.bf16 %v993
    %v1032 = vunpack.c.l.bf16 %v994
    %v1033 = vunpack.c.l.bf16 %v995
    %v1034 = vunpack.c.l.bf16 %v996
    %v1035 = vunpack.c.l.bf16 %v997
    %v1036 = vunpack.c.l.bf16 %v998
    %v1037 = vunpack.c.l.bf16 %v999
    %v1038 = vunpack.c.l.bf16 %v1000
    %v1039 = vunpack.c.l.bf16 %v1001
    %v1040 = vunpack.c.l.bf16 %v1002
    %v1041 = vunpack.c.l.bf16 %v1003
    %v1042 = vunpack.c.l.bf16 %v1004
    %v1043 = vunpack.c.l.bf16 %v1005
    %v1044 = vunpack.c.l.bf16 %v1006
    %v1045 = vunpack.c.l.bf16 %v1007
    %v1046 = vunpack.c.l.bf16 %v1008
    %v1047 = vunpack.c.l.bf16 %v1009
    %v1048 = vunpack.c.l.bf16 %v1010
    %v1049 = vunpack.c.l.bf16 %v1011
    %v1050 = vunpack.c.l.bf16 %v1012
    %v1051 = vunpack.c.l.bf16 %v1013
    %v1052 = vunpack.c.l.bf16 %v1014
    %v1053 = vunpack.c.l.bf16 %v1015
    %v1054 = vunpack.c.l.bf16 %v1016
    %v1055 = vunpack.c.l.bf16 %v1017
    %v1056 = vunpack.c.l.bf16 %v1018
    %v1057 = vunpack.c.l.bf16 %v1019
    %v1058 = vunpack.c.l.bf16 %v1020
    %v1059 = vunpack.c.l.bf16 %v1021
    %v1060 = vunpack.c.l.bf16 %v1022
    %v1061 = vunpack.c.l.bf16 %v1023
    %v1062 = vunpack.c.l.bf16 %v1024
    %v1063 = vld [vmem:[#allocation2] sm:$0x1]
    %v1065 = vlaneseq
    %v1066 = vshrl.u32 %v1065, 7
    %v1067 = vsub.s32 0, %v1066
    %v1068 = vrot.slane %v1063, %v1067
    %vm1070 = vcmask 359424
    %v1072 = vsel %vm1070, %v986, 0
    %v1075 = vsel %vm104, %v1062, 0
    %1077 = vmatprep.subr.mxu0 0.0
    %1078 = vmatpush1.msra.mxu0 %v1025
    %1079 = vmatprep.subr.mxu0 0.0
    %1080 = vmatpush1.msra.mxu0 %v1026
    %1081 = vmatprep.subr.mxu0 0.0
    %1082 = vmatpush1.msra.mxu0 %v1027
    %1083 = vmatprep.subr.mxu0 0.0
    %1084 = vmatpush1.msra.mxu0 %v1028
    %1085 = vmatprep.subr.mxu0 0.0
    %1086 = vmatpush1.msra.mxu0 %v1029
    %1087 = vmatprep.subr.mxu0 0.0
    %1088 = vmatpush1.msra.mxu0 %v1030
    %1089 = vmatprep.subr.mxu0 0.0
    %1090 = vmatpush1.msra.mxu0 %v1031
    %1091 = vmatprep.subr.mxu0 0.0
    %1092 = vmatpush1.msra.mxu0 %v1032
    %1093 = vmatprep.subr.mxu0 0.0
    %1094 = vmatpush1.msra.mxu0 %v1033
    %1095 = vmatprep.subr.mxu0 0.0
    %1096 = vmatpush1.msra.mxu0 %v1034
    %1097 = vmatprep.subr.mxu0 0.0
    %1098 = vmatpush1.msra.mxu0 %v1035
    %1099 = vmatprep.subr.mxu0 0.0
    %1100 = vmatpush1.msra.mxu0 %v1036
    %1101 = vmatprep.subr.mxu0 0.0
    %1102 = vmatpush1.msra.mxu0 %v1037
    %1103 = vmatprep.subr.mxu0 0.0
    %1104 = vmatpush1.msra.mxu0 %v1038
    %1105 = vmatprep.subr.mxu0 0.0
    %1106 = vmatpush1.msra.mxu0 %v1039
    %1107 = vmatprep.subr.mxu0 0.0
    %1108 = vmatpush1.msra.mxu0 %v1040
    %1109 = vmatprep.subr.mxu0 0.0
    %1110 = vmatpush1.msra.mxu0 %v1041
    %1111 = vmatprep.subr.mxu0 0.0
    %1112 = vmatpush1.msra.mxu0 %v1042
    %1113 = vmatprep.subr.mxu0 0.0
    %1114 = vmatpush1.msra.mxu0 %v1043
    %1115 = vmatprep.subr.mxu0 0.0
    %1116 = vmatpush1.msra.mxu0 %v1044
    %1117 = vmatprep.subr.mxu0 0.0
    %1118 = vmatpush1.msra.mxu0 %v1045
    %1119 = vmatprep.subr.mxu0 0.0
    %1120 = vmatpush1.msra.mxu0 %v1046
    %1121 = vmatprep.subr.mxu0 0.0
    %1122 = vmatpush1.msra.mxu0 %v1047
    %1123 = vmatprep.subr.mxu0 0.0
    %1124 = vmatpush1.msra.mxu0 %v1048
    %1125 = vmatprep.subr.mxu0 0.0
    %1126 = vmatpush1.msra.mxu0 %v1049
    %1127 = vmatprep.subr.mxu0 0.0
    %1128 = vmatpush1.msra.mxu0 %v1050
    %1129 = vmatprep.subr.mxu0 0.0
    %1130 = vmatpush1.msra.mxu0 %v1051
    %1131 = vmatprep.subr.mxu0 0.0
    %1132 = vmatpush1.msra.mxu0 %v1052
    %1133 = vmatprep.subr.mxu0 0.0
    %1134 = vmatpush1.msra.mxu0 %v1053
    %1135 = vmatprep.subr.mxu0 0.0
    %1136 = vmatpush1.msra.mxu0 %v1054
    %1137 = vmatprep.subr.mxu0 0.0
    %1138 = vmatpush1.msra.mxu0 %v1055
    %1139 = vmatprep.subr.mxu0 0.0
    %1140 = vmatpush1.msra.mxu0 %v1056
    %1141 = vmatprep.mubr.f32.mxu0 %v985
    %1142 = vmatmul.mubr.f32.gmra.mrb[0].mxu0 %v984
    %v1143 = vpop.f32.mrb[0].mxu0
    %v1144 = vadd.f32 %v1068, %v1143
    %v1145 = vpop.f32.mrb[0].mxu0
    %1146 = vdwg.mxu0
    %1147 = vmatprep.subr.mxu0 0.0
    %1148 = vmatpush1.msra.mxu0 %v1057
    %1149 = vmatprep.subr.mxu0 0.0
    %1150 = vmatpush1.msra.mxu0 %v1058
    %1151 = vmatprep.subr.mxu0 0.0
    %1152 = vmatpush1.msra.mxu0 %v1059
    %1153 = vmatprep.subr.mxu0 0.0
    %1154 = vmatpush1.msra.mxu0 %v1060
    %1155 = vmatprep.subr.mxu0 0.0
    %1156 = vmatpush1.msra.mxu0 %v1061
    %1157 = vmatprep.subr.mxu0 0.0
    %1158 = vmatpush1.msra.mxu0 %v1075
    %1159 = vmatprep.subr.mxu0 0.0
    %1160 = vmatpush1.msra.mxu0 0.0
    %1161 = vmatprep.subr.mxu0 0.0
    %1162 = vmatpush1.msra.mxu0 0.0
    %1163 = vmatprep.subr.mxu0 0.0
    %1164 = vmatpush1.msra.mxu0 0.0
    %1165 = vmatprep.subr.mxu0 0.0
    %1166 = vmatpush1.msra.mxu0 0.0
    %1167 = vmatprep.subr.mxu0 0.0
    %1168 = vmatpush1.msra.mxu0 0.0
    %1169 = vmatprep.subr.mxu0 0.0
    %1170 = vmatpush1.msra.mxu0 0.0
    %1171 = vmatprep.subr.mxu0 0.0
    %1172 = vmatpush1.msra.mxu0 0.0
    %1173 = vmatprep.subr.mxu0 0.0
    %1174 = vmatpush1.msra.mxu0 0.0
    %1175 = vmatprep.subr.mxu0 0.0
    %1176 = vmatpush1.msra.mxu0 0.0
    %1177 = vmatprep.subr.mxu0 0.0
    %1178 = vmatpush1.msra.mxu0 0.0
    %1179 = vmatprep.subr.mxu0 0.0
    %1180 = vmatpush1.msra.mxu0 0.0
    %1181 = vmatprep.subr.mxu0 0.0
    %1182 = vmatpush1.msra.mxu0 0.0
    %1183 = vmatprep.subr.mxu0 0.0
    %1184 = vmatpush1.msra.mxu0 0.0
    %1185 = vmatprep.subr.mxu0 0.0
    %1186 = vmatpush1.msra.mxu0 0.0
    %1187 = vmatprep.subr.mxu0 0.0
    %1188 = vmatpush1.msra.mxu0 0.0
    %1189 = vmatprep.subr.mxu0 0.0
    %1190 = vmatpush1.msra.mxu0 0.0
    %1191 = vmatprep.subr.mxu0 0.0
    %1192 = vmatpush1.msra.mxu0 0.0
    %1193 = vmatprep.subr.mxu0 0.0
    %1194 = vmatpush1.msra.mxu0 0.0
    %1195 = vmatprep.subr.mxu0 0.0
    %1196 = vmatpush1.msra.mxu0 0.0
    %1197 = vmatprep.subr.mxu0 0.0
    %1198 = vmatpush1.msra.mxu0 0.0
    %1199 = vmatprep.subr.mxu0 0.0
    %1200 = vmatpush1.msra.mxu0 0.0
    %1201 = vmatprep.subr.mxu0 0.0
    %1202 = vmatpush1.msra.mxu0 0.0
    %1203 = vmatprep.subr.mxu0 0.0
    %1204 = vmatpush1.msra.mxu0 0.0
    %1205 = vmatprep.subr.mxu0 0.0
    %1206 = vmatpush1.msra.mxu0 0.0
    %1207 = vmatprep.subr.mxu0 0.0
    %1208 = vmatpush1.msra.mxu0 0.0
    %1209 = vmatprep.subr.mxu0 0.0
    %1210 = vmatpush1.msra.mxu0 0.0
    %1211 = vmatprep.mubr.f32.mxu0 0.0
    %1212 = vmatmul.mubr.f32.gmra.mrb[0].mxu0 %v1072
    %v1213 = vpop.f32.mrb[0].mxu0
    %v1214 = vadd.f32 %v1144, %v1213
    %v1215 = vpop.f32.mrb[0].mxu0
    %1216 = vdwg.mxu0
    %v1217 = vld [vmem:[%s9] sm:$0xff]
    %v1218 = vld [vmem:[%s9 + $0x8] sm:$0xff]
    %v1219 = vunpack.c.l.bf16 %v1217
    %v1220 = vunpack.c.h.bf16 %v1217
    %v1221 = vunpack.c.l.bf16 %v1218
    %v1222 = vunpack.c.h.bf16 %v1218
    %v1223 = vld [vmem:[%s10] sm:$0xff]
    %v1224 = vunpack.c.l.bf16 %v1223
    %v1225 = vunpack.c.h.bf16 %v1223
    %v1228 = vcombine.high %v1224, %v1224
    %v1229 = vcombine.high %v1225, %v1225
    %v1230 = vsel %vm104, %v1224, 0
    %v1232 = vsel %vm104, %v1228, 0
    %v1234 = vsel %vm104, %v1225, 0
    %v1236 = vsel %vm104, %v1229, 0
    %1238 = vmatprep.subr.mxu0 %v1232
    %1239 = vmatpush1.msra.mxu0 %v1230
    %1240 = vmatprep.subr.mxu0 0.0
    %1241 = vmatpush1.msra.mxu0 0.0
    %1242 = vmatprep.subr.mxu0 0.0
    %1243 = vmatpush1.msra.mxu0 0.0
    %1244 = vmatprep.subr.mxu0 0.0
    %1245 = vmatpush1.msra.mxu0 0.0
    %1246 = vmatprep.subr.mxu0 0.0
    %1247 = vmatpush1.msra.mxu0 0.0
    %1248 = vmatprep.subr.mxu0 0.0
    %1249 = vmatpush1.msra.mxu0 0.0
    %1250 = vmatprep.subr.mxu0 0.0
    %1251 = vmatpush1.msra.mxu0 0.0
    %1252 = vmatprep.subr.mxu0 0.0
    %1253 = vmatpush1.msra.mxu0 0.0
    %1254 = vmatprep.subr.mxu0 0.0
    %1255 = vmatpush1.msra.mxu0 0.0
    %1256 = vmatprep.subr.mxu0 0.0
    %1257 = vmatpush1.msra.mxu0 0.0
    %1258 = vmatprep.subr.mxu0 0.0
    %1259 = vmatpush1.msra.mxu0 0.0
    %1260 = vmatprep.subr.mxu0 0.0
    %1261 = vmatpush1.msra.mxu0 0.0
    %1262 = vmatprep.subr.mxu0 0.0
    %1263 = vmatpush1.msra.mxu0 0.0
    %1264 = vmatprep.subr.mxu0 0.0
    %1265 = vmatpush1.msra.mxu0 0.0
    %1266 = vmatprep.subr.mxu0 0.0
    %1267 = vmatpush1.msra.mxu0 0.0
    %1268 = vmatprep.subr.mxu0 0.0
    %1269 = vmatpush1.msra.mxu0 0.0
    %1270 = vmatprep.subr.mxu0 0.0
    %1271 = vmatpush1.msra.mxu0 0.0
    %1272 = vmatprep.subr.mxu0 0.0
    %1273 = vmatpush1.msra.mxu0 0.0
    %1274 = vmatprep.subr.mxu0 0.0
    %1275 = vmatpush1.msra.mxu0 0.0
    %1276 = vmatprep.subr.mxu0 0.0
    %1277 = vmatpush1.msra.mxu0 0.0
    %1278 = vmatprep.subr.mxu0 0.0
    %1279 = vmatpush1.msra.mxu0 0.0
    %1280 = vmatprep.subr.mxu0 0.0
    %1281 = vmatpush1.msra.mxu0 0.0
    %1282 = vmatprep.subr.mxu0 0.0
    %1283 = vmatpush1.msra.mxu0 0.0
    %1284 = vmatprep.subr.mxu0 0.0
    %1285 = vmatpush1.msra.mxu0 0.0
    %1286 = vmatprep.subr.mxu0 0.0
    %1287 = vmatpush1.msra.mxu0 0.0
    %1288 = vmatprep.subr.mxu0 0.0
    %1289 = vmatpush1.msra.mxu0 0.0
    %1290 = vmatprep.subr.mxu0 0.0
    %1291 = vmatpush1.msra.mxu0 0.0
    %1292 = vmatprep.subr.mxu0 0.0
    %1293 = vmatpush1.msra.mxu0 0.0
    %1294 = vmatprep.subr.mxu0 0.0
    %1295 = vmatpush1.msra.mxu0 0.0
    %1296 = vmatprep.subr.mxu0 0.0
    %1297 = vmatpush1.msra.mxu0 0.0
    %1298 = vmatprep.subr.mxu0 0.0
    %1299 = vmatpush1.msra.mxu0 0.0
    %1300 = vmatprep.subr.mxu0 0.0
    %1301 = vmatpush1.msra.mxu0 0.0
    %1302 = vmatprep.mubr.f32.mxu0 0.0
    %1303 = vmatmul.mubr.f32.gmra.mrb[0].mxu0 %v102
    %v1304 = vpop.f32.mrb[0].mxu0
    %v1305 = vadd.f32 0.0, %v1304
    %v1306 = vpop.f32.mrb[0].mxu0
    %v1307 = vadd.f32 0.0, %v1306
    %1308 = vdwg.mxu0
    %1309 = vmatprep.subr.mxu0 %v1236
    %1310 = vmatpush1.msra.mxu0 %v1234
    %1311 = vmatprep.subr.mxu0 0.0
    %1312 = vmatpush1.msra.mxu0 0.0
    %1313 = vmatprep.subr.mxu0 0.0
    %1314 = vmatpush1.msra.mxu0 0.0
    %1315 = vmatprep.subr.mxu0 0.0
    %1316 = vmatpush1.msra.mxu0 0.0
    %1317 = vmatprep.subr.mxu0 0.0
    %1318 = vmatpush1.msra.mxu0 0.0
    %1319 = vmatprep.subr.mxu0 0.0
    %1320 = vmatpush1.msra.mxu0 0.0
    %1321 = vmatprep.subr.mxu0 0.0
    %1322 = vmatpush1.msra.mxu0 0.0
    %1323 = vmatprep.subr.mxu0 0.0
    %1324 = vmatpush1.msra.mxu0 0.0
    %1325 = vmatprep.subr.mxu0 0.0
    %1326 = vmatpush1.msra.mxu0 0.0
    %1327 = vmatprep.subr.mxu0 0.0
    %1328 = vmatpush1.msra.mxu0 0.0
    %1329 = vmatprep.subr.mxu0 0.0
    %1330 = vmatpush1.msra.mxu0 0.0
    %1331 = vmatprep.subr.mxu0 0.0
    %1332 = vmatpush1.msra.mxu0 0.0
    %1333 = vmatprep.subr.mxu0 0.0
    %1334 = vmatpush1.msra.mxu0 0.0
    %1335 = vmatprep.subr.mxu0 0.0
    %1336 = vmatpush1.msra.mxu0 0.0
    %1337 = vmatprep.subr.mxu0 0.0
    %1338 = vmatpush1.msra.mxu0 0.0
    %1339 = vmatprep.subr.mxu0 0.0
    %1340 = vmatpush1.msra.mxu0 0.0
    %1341 = vmatprep.subr.mxu0 0.0
    %1342 = vmatpush1.msra.mxu0 0.0
    %1343 = vmatprep.subr.mxu0 0.0
    %1344 = vmatpush1.msra.mxu0 0.0
    %1345 = vmatprep.subr.mxu0 0.0
    %1346 = vmatpush1.msra.mxu0 0.0
    %1347 = vmatprep.subr.mxu0 0.0
    %1348 = vmatpush1.msra.mxu0 0.0
    %1349 = vmatprep.subr.mxu0 0.0
    %1350 = vmatpush1.msra.mxu0 0.0
    %1351 = vmatprep.subr.mxu0 0.0
    %1352 = vmatpush1.msra.mxu0 0.0
    %1353 = vmatprep.subr.mxu0 0.0
    %1354 = vmatpush1.msra.mxu0 0.0
    %1355 = vmatprep.subr.mxu0 0.0
    %1356 = vmatpush1.msra.mxu0 0.0
    %1357 = vmatprep.subr.mxu0 0.0
    %1358 = vmatpush1.msra.mxu0 0.0
    %1359 = vmatprep.subr.mxu0 0.0
    %1360 = vmatpush1.msra.mxu0 0.0
    %1361 = vmatprep.subr.mxu0 0.0
    %1362 = vmatpush1.msra.mxu0 0.0
    %1363 = vmatprep.subr.mxu0 0.0
    %1364 = vmatpush1.msra.mxu0 0.0
    %1365 = vmatprep.subr.mxu0 0.0
    %1366 = vmatpush1.msra.mxu0 0.0
    %1367 = vmatprep.subr.mxu0 0.0
    %1368 = vmatpush1.msra.mxu0 0.0
    %1369 = vmatprep.subr.mxu0 0.0
    %1370 = vmatpush1.msra.mxu0 0.0
    %1371 = vmatprep.subr.mxu0 0.0
    %1372 = vmatpush1.msra.mxu0 0.0
    %1373 = vmatprep.mubr.f32.mxu0 0.0
    %1374 = vmatmul.mubr.f32.gmra.mrb[0].mxu0 %v102
    %v1375 = vpop.f32.mrb[0].mxu0
    %v1376 = vadd.f32 0.0, %v1375
    %v1377 = vpop.f32.mrb[0].mxu0
    %v1378 = vadd.f32 0.0, %v1377
    %1379 = vdwg.mxu0
    %1380 = vmatprep.subr.mxu0 %v1220
    %1381 = vmatpush1.msra.mxu0 %v1219
    %1382 = vmatprep.subr.mxu0 0.0
    %1383 = vmatpush1.msra.mxu0 0.0
    %1384 = vmatprep.subr.mxu0 0.0
    %1385 = vmatpush1.msra.mxu0 0.0
    %1386 = vmatprep.subr.mxu0 0.0
    %1387 = vmatpush1.msra.mxu0 0.0
    %1388 = vmatprep.subr.mxu0 0.0
    %1389 = vmatpush1.msra.mxu0 0.0
    %1390 = vmatprep.subr.mxu0 0.0
    %1391 = vmatpush1.msra.mxu0 0.0
    %1392 = vmatprep.subr.mxu0 0.0
    %1393 = vmatpush1.msra.mxu0 0.0
    %1394 = vmatprep.subr.mxu0 0.0
    %1395 = vmatpush1.msra.mxu0 0.0
    %1396 = vmatprep.subr.mxu0 0.0
    %1397 = vmatpush1.msra.mxu0 0.0
    %1398 = vmatprep.subr.mxu0 0.0
    %1399 = vmatpush1.msra.mxu0 0.0
    %1400 = vmatprep.subr.mxu0 0.0
    %1401 = vmatpush1.msra.mxu0 0.0
    %1402 = vmatprep.subr.mxu0 0.0
    %1403 = vmatpush1.msra.mxu0 0.0
    %1404 = vmatprep.subr.mxu0 0.0
    %1405 = vmatpush1.msra.mxu0 0.0
    %1406 = vmatprep.subr.mxu0 0.0
    %1407 = vmatpush1.msra.mxu0 0.0
    %1408 = vmatprep.subr.mxu0 0.0
    %1409 = vmatpush1.msra.mxu0 0.0
    %1410 = vmatprep.subr.mxu0 0.0
    %1411 = vmatpush1.msra.mxu0 0.0
    %1412 = vmatprep.subr.mxu0 0.0
    %1413 = vmatpush1.msra.mxu0 0.0
    %1414 = vmatprep.subr.mxu0 0.0
    %1415 = vmatpush1.msra.mxu0 0.0
    %1416 = vmatprep.subr.mxu0 0.0
    %1417 = vmatpush1.msra.mxu0 0.0
    %1418 = vmatprep.subr.mxu0 0.0
    %1419 = vmatpush1.msra.mxu0 0.0
    %1420 = vmatprep.subr.mxu0 0.0
    %1421 = vmatpush1.msra.mxu0 0.0
    %1422 = vmatprep.subr.mxu0 0.0
    %1423 = vmatpush1.msra.mxu0 0.0
    %1424 = vmatprep.subr.mxu0 0.0
    %1425 = vmatpush1.msra.mxu0 0.0
    %1426 = vmatprep.subr.mxu0 0.0
    %1427 = vmatpush1.msra.mxu0 0.0
    %1428 = vmatprep.subr.mxu0 0.0
    %1429 = vmatpush1.msra.mxu0 0.0
    %1430 = vmatprep.subr.mxu0 0.0
    %1431 = vmatpush1.msra.mxu0 0.0
    %1432 = vmatprep.subr.mxu0 0.0
    %1433 = vmatpush1.msra.mxu0 0.0
    %1434 = vmatprep.subr.mxu0 0.0
    %1435 = vmatpush1.msra.mxu0 0.0
    %1436 = vmatprep.subr.mxu0 0.0
    %1437 = vmatpush1.msra.mxu0 0.0
    %1438 = vmatprep.subr.mxu0 0.0
    %1439 = vmatpush1.msra.mxu0 0.0
    %1440 = vmatprep.subr.mxu0 0.0
    %1441 = vmatpush1.msra.mxu0 0.0
    %1442 = vmatprep.subr.mxu0 0.0
    %1443 = vmatpush1.msra.mxu0 0.0
    %1444 = vmatprep.mubr.f32.mxu0 0.0
    %1445 = vmatmul.mubr.f32.gmra.mrb[0].mxu0 %v257
    %v1446 = vpop.f32.mrb[0].mxu0
    %v1447 = vadd.f32 %v1305, %v1446
    %v1448 = vpop.f32.mrb[0].mxu0
    %v1449 = vadd.f32 %v1307, %v1448
    %1450 = vdwg.mxu0
    %1451 = vmatprep.subr.mxu0 %v1222
    %1452 = vmatpush1.msra.mxu0 %v1221
    %1453 = vmatprep.subr.mxu0 0.0
    %1454 = vmatpush1.msra.mxu0 0.0
    %1455 = vmatprep.subr.mxu0 0.0
    %1456 = vmatpush1.msra.mxu0 0.0
    %1457 = vmatprep.subr.mxu0 0.0
    %1458 = vmatpush1.msra.mxu0 0.0
    %1459 = vmatprep.subr.mxu0 0.0
    %1460 = vmatpush1.msra.mxu0 0.0
    %1461 = vmatprep.subr.mxu0 0.0
    %1462 = vmatpush1.msra.mxu0 0.0
    %1463 = vmatprep.subr.mxu0 0.0
    %1464 = vmatpush1.msra.mxu0 0.0
    %1465 = vmatprep.subr.mxu0 0.0
    %1466 = vmatpush1.msra.mxu0 0.0
    %1467 = vmatprep.subr.mxu0 0.0
    %1468 = vmatpush1.msra.mxu0 0.0
    %1469 = vmatprep.subr.mxu0 0.0
    %1470 = vmatpush1.msra.mxu0 0.0
    %1471 = vmatprep.subr.mxu0 0.0
    %1472 = vmatpush1.msra.mxu0 0.0
    %1473 = vmatprep.subr.mxu0 0.0
    %1474 = vmatpush1.msra.mxu0 0.0
    %1475 = vmatprep.subr.mxu0 0.0
    %1476 = vmatpush1.msra.mxu0 0.0
    %1477 = vmatprep.subr.mxu0 0.0
    %1478 = vmatpush1.msra.mxu0 0.0
    %1479 = vmatprep.subr.mxu0 0.0
    %1480 = vmatpush1.msra.mxu0 0.0
    %1481 = vmatprep.subr.mxu0 0.0
    %1482 = vmatpush1.msra.mxu0 0.0
    %1483 = vmatprep.subr.mxu0 0.0
    %1484 = vmatpush1.msra.mxu0 0.0
    %1485 = vmatprep.subr.mxu0 0.0
    %1486 = vmatpush1.msra.mxu0 0.0
    %1487 = vmatprep.subr.mxu0 0.0
    %1488 = vmatpush1.msra.mxu0 0.0
    %1489 = vmatprep.subr.mxu0 0.0
    %1490 = vmatpush1.msra.mxu0 0.0
    %1491 = vmatprep.subr.mxu0 0.0
    %1492 = vmatpush1.msra.mxu0 0.0
    %1493 = vmatprep.subr.mxu0 0.0
    %1494 = vmatpush1.msra.mxu0 0.0
    %1495 = vmatprep.subr.mxu0 0.0
    %1496 = vmatpush1.msra.mxu0 0.0
    %1497 = vmatprep.subr.mxu0 0.0
    %1498 = vmatpush1.msra.mxu0 0.0
    %1499 = vmatprep.subr.mxu0 0.0
    %1500 = vmatpush1.msra.mxu0 0.0
    %1501 = vmatprep.subr.mxu0 0.0
    %1502 = vmatpush1.msra.mxu0 0.0
    %1503 = vmatprep.subr.mxu0 0.0
    %1504 = vmatpush1.msra.mxu0 0.0
    %1505 = vmatprep.subr.mxu0 0.0
    %1506 = vmatpush1.msra.mxu0 0.0
    %1507 = vmatprep.subr.mxu0 0.0
    %1508 = vmatpush1.msra.mxu0 0.0
    %1509 = vmatprep.subr.mxu0 0.0
    %1510 = vmatpush1.msra.mxu0 0.0
    %1511 = vmatprep.subr.mxu0 0.0
    %1512 = vmatpush1.msra.mxu0 0.0
    %1513 = vmatprep.subr.mxu0 0.0
    %1514 = vmatpush1.msra.mxu0 0.0
    %1515 = vmatprep.mubr.f32.mxu0 0.0
    %1516 = vmatmul.mubr.f32.gmra.mrb[0].mxu0 %v257
    %v1517 = vpop.f32.mrb[0].mxu0
    %v1518 = vadd.f32 %v1376, %v1517
    %v1519 = vpop.f32.mrb[0].mxu0
    %v1520 = vadd.f32 %v1378, %v1519
    %1521 = vdwg.mxu0
    %v1522 = vld [vmem:[%s11] sm:$0xf]
    %v1524 = vlaneseq
    %v1525 = vshrl.u32 %v1524, 7
    %v1526 = vsub.s32 0, %v1525
    %v1527 = vrot.slane %v1522, %v1526
    %v1528 = vlaneseq
    %v1529 = vshrl.u32 %v1528, 7
    %v1530 = vsub.s32 1, %v1529
    %v1531 = vrot.slane %v1522, %v1530
    %v1532 = vlaneseq
    %v1533 = vshrl.u32 %v1532, 7
    %v1534 = vsub.s32 2, %v1533
    %v1535 = vrot.slane %v1522, %v1534
    %v1536 = vlaneseq
    %v1537 = vshrl.u32 %v1536, 7
    %v1538 = vsub.s32 3, %v1537
    %v1539 = vrot.slane %v1522, %v1538
    %v1544 = vadd.f32 %v1447, %v1527
    %v1545 = vadd.f32 %v1449, %v1531
    %v1546 = vadd.f32 %v1518, %v1535
    %v1547 = vadd.f32 %v1520, %v1539
    %v1548 = vmax.f32 %v1544, 0.0
    %v1549 = vmax.f32 %v1545, 0.0
    %v1550 = vmax.f32 %v1546, 0.0
    %v1551 = vmax.f32 %v1547, 0.0
    %v1552 = vld [vmem:[#allocation6] sm:$0xff]
    %v1553 = vld [vmem:[#allocation6 + $0x8] sm:$0xf]
    %v1554 = vld [vmem:[#allocation6 + $0xc] sm:$0xff]
    %v1555 = vld [vmem:[#allocation6 + $0x14] sm:$0xf]
    %v1556 = vld [vmem:[#allocation6 + $0x18] sm:$0xff]
    %v1557 = vld [vmem:[#allocation6 + $0x20] sm:$0xf]
    %v1558 = vld [vmem:[#allocation6 + $0x24] sm:$0xff]
    %v1559 = vld [vmem:[#allocation6 + $0x2c] sm:$0xf]
    %v1560 = vld [vmem:[#allocation6 + $0x30] sm:$0xff]
    %v1561 = vld [vmem:[#allocation6 + $0x38] sm:$0xf]
    %v1562 = vld [vmem:[#allocation6 + $0x3c] sm:$0xff]
    %v1563 = vld [vmem:[#allocation6 + $0x44] sm:$0xf]
    %v1564 = vld [vmem:[#allocation6 + $0x48] sm:$0xff]
    %v1565 = vld [vmem:[#allocation6 + $0x50] sm:$0xf]
    %v1566 = vld [vmem:[#allocation6 + $0x54] sm:$0xff]
    %v1567 = vld [vmem:[#allocation6 + $0x5c] sm:$0xf]
    %v1568 = vld [vmem:[#allocation6 + $0x60] sm:$0xff]
    %v1569 = vld [vmem:[#allocation6 + $0x68] sm:$0xf]
    %v1570 = vld [vmem:[#allocation6 + $0x6c] sm:$0xff]
    %v1571 = vld [vmem:[#allocation6 + $0x74] sm:$0xf]
    %v1572 = vld [vmem:[#allocation6 + $0x78] sm:$0xff]
    %v1573 = vld [vmem:[#allocation6 + $0x80] sm:$0xf]
    %v1574 = vld [vmem:[#allocation6 + $0x84] sm:$0xff]
    %v1575 = vld [vmem:[#allocation6 + $0x8c] sm:$0xf]
    %v1576 = vld [vmem:[#allocation6 + $0x90] sm:$0xff]
    %v1577 = vld [vmem:[#allocation6 + $0x98] sm:$0xf]
    %v1578 = vld [vmem:[#allocation6 + $0x9c] sm:$0xff]
    %v1579 = vld [vmem:[#allocation6 + $0xa4] sm:$0xf]
    %v1580 = vld [vmem:[#allocation6 + $0xa8] sm:$0xff]
    %v1581 = vld [vmem:[#allocation6 + $0xb0] sm:$0xf]
    %v1582 = vld [vmem:[#allocation6 + $0xb4] sm:$0xff]
    %v1583 = vld [vmem:[#allocation6 + $0xbc] sm:$0xf]
    %v1584 = vld [vmem:[#allocation6 + $0xc0] sm:$0xff]
    %v1585 = vld [vmem:[#allocation6 + $0xc8] sm:$0xf]
    %v1586 = vld [vmem:[#allocation6 + $0xcc] sm:$0xff]
    %v1587 = vld [vmem:[#allocation6 + $0xd4] sm:$0xf]
    %v1588 = vld [vmem:[#allocation6 + $0xd8] sm:$0xff]
    %v1589 = vld [vmem:[#allocation6 + $0xe0] sm:$0xf]
    %v1590 = vld [vmem:[#allocation6 + $0xe4] sm:$0xff]
    %v1591 = vld [vmem:[#allocation6 + $0xec] sm:$0xf]
    %v1592 = vld [vmem:[#allocation6 + $0xf0] sm:$0xff]
    %v1593 = vld [vmem:[#allocation6 + $0xf8] sm:$0xf]
    %v1594 = vld [vmem:[#allocation6 + $0xfc] sm:$0xff]
    %v1595 = vld [vmem:[#allocation6 + $0x104] sm:$0xf]
    %v1596 = vld [vmem:[#allocation6 + $0x108] sm:$0xff]
    %v1597 = vld [vmem:[#allocation6 + $0x110] sm:$0xf]
    %v1598 = vld [vmem:[#allocation6 + $0x114] sm:$0xff]
    %v1599 = vld [vmem:[#allocation6 + $0x11c] sm:$0xf]
    %v1600 = vld [vmem:[#allocation6 + $0x120] sm:$0xff]
    %v1601 = vld [vmem:[#allocation6 + $0x128] sm:$0xf]
    %v1602 = vld [vmem:[#allocation6 + $0x12c] sm:$0xff]
    %v1603 = vld [vmem:[#allocation6 + $0x134] sm:$0xf]
    %v1604 = vld [vmem:[#allocation6 + $0x138] sm:$0xff]
    %v1605 = vld [vmem:[#allocation6 + $0x140] sm:$0xf]
    %v1606 = vld [vmem:[#allocation6 + $0x144] sm:$0xff]
    %v1607 = vld [vmem:[#allocation6 + $0x14c] sm:$0xf]
    %v1608 = vld [vmem:[#allocation6 + $0x150] sm:$0xff]
    %v1609 = vld [vmem:[#allocation6 + $0x158] sm:$0xf]
    %v1610 = vld [vmem:[#allocation6 + $0x15c] sm:$0xff]
    %v1611 = vld [vmem:[#allocation6 + $0x164] sm:$0xf]
    %v1612 = vld [vmem:[#allocation6 + $0x168] sm:$0xff]
    %v1613 = vld [vmem:[#allocation6 + $0x170] sm:$0xf]
    %v1614 = vld [vmem:[#allocation6 + $0x174] sm:$0xff]
    %v1615 = vld [vmem:[#allocation6 + $0x17c] sm:$0xf]
    %v1616 = vld [vmem:[#allocation6 + $0x180] sm:$0xff]
    %v1617 = vld [vmem:[#allocation6 + $0x188] sm:$0xf]
    %v1618 = vld [vmem:[#allocation6 + $0x18c] sm:$0xff]
    %v1619 = vld [vmem:[#allocation6 + $0x194] sm:$0xf]
    %v1620 = vld [vmem:[#allocation6 + $0x198] sm:$0xff]
    %v1621 = vld [vmem:[#allocation6 + $0x1a0] sm:$0xf]
    %v1622 = vld [vmem:[#allocation6 + $0x1a4] sm:$0xff]
    %v1623 = vld [vmem:[#allocation6 + $0x1ac] sm:$0xf]
    %v1624 = vld [vmem:[#allocation6 + $0x1b0] sm:$0xff]
    %v1625 = vld [vmem:[#allocation6 + $0x1b8] sm:$0xf]
    %v1626 = vld [vmem:[#allocation6 + $0x1bc] sm:$0xff]
    %v1627 = vld [vmem:[#allocation6 + $0x1c4] sm:$0xf]
    %v1628 = vld [vmem:[#allocation6 + $0x1c8] sm:$0xff]
    %v1629 = vld [vmem:[#allocation6 + $0x1d0] sm:$0xf]
    %v1630 = vld [vmem:[#allocation6 + $0x1d4] sm:$0xff]
    %v1631 = vld [vmem:[#allocation6 + $0x1dc] sm:$0xf]
    %v1632 = vld [vmem:[#allocation6 + $0x1e0] sm:$0xff]
    %v1633 = vld [vmem:[#allocation6 + $0x1e8] sm:$0xf]
    %v1634 = vld [vmem:[#allocation6 + $0x1ec] sm:$0xff]
    %v1635 = vld [vmem:[#allocation6 + $0x1f4] sm:$0xf]
    %v1636 = vld [vmem:[#allocation6 + $0x1f8] sm:$0xff]
    %v1637 = vld [vmem:[#allocation6 + $0x200] sm:$0xf]
    %v1638 = vld [vmem:[#allocation6 + $0x204] sm:$0xff]
    %v1639 = vld [vmem:[#allocation6 + $0x20c] sm:$0xf]
    %v1640 = vld [vmem:[#allocation6 + $0x210] sm:$0xff]
    %v1641 = vld [vmem:[#allocation6 + $0x218] sm:$0xf]
    %v1642 = vld [vmem:[#allocation6 + $0x21c] sm:$0xff]
    %v1643 = vld [vmem:[#allocation6 + $0x224] sm:$0xf]
    %v1644 = vld [vmem:[#allocation6 + $0x228] sm:$0xff]
    %v1645 = vld [vmem:[#allocation6 + $0x230] sm:$0xf]
    %v1646 = vld [vmem:[#allocation6 + $0x234] sm:$0xff]
    %v1647 = vld [vmem:[#allocation6 + $0x23c] sm:$0xf]
    %v1648 = vld [vmem:[#allocation6 + $0x240] sm:$0xff]
    %v1649 = vld [vmem:[#allocation6 + $0x248] sm:$0xf]
    %v1650 = vld [vmem:[#allocation6 + $0x24c] sm:$0xff]
    %v1651 = vld [vmem:[#allocation6 + $0x254] sm:$0xf]
    %v1652 = vunpack.c.l.bf16 %v1552
    %v1653 = vunpack.c.h.bf16 %v1552
    %v1654 = vunpack.c.l.bf16 %v1553
    %v1655 = vunpack.c.l.bf16 %v1554
    %v1656 = vunpack.c.h.bf16 %v1554
    %v1657 = vunpack.c.l.bf16 %v1555
    %v1658 = vunpack.c.l.bf16 %v1556
    %v1659 = vunpack.c.h.bf16 %v1556
    %v1660 = vunpack.c.l.bf16 %v1557
    %v1661 = vunpack.c.l.bf16 %v1558
    %v1662 = vunpack.c.h.bf16 %v1558
    %v1663 = vunpack.c.l.bf16 %v1559
    %v1664 = vunpack.c.l.bf16 %v1560
    %v1665 = vunpack.c.h.bf16 %v1560
    %v1666 = vunpack.c.l.bf16 %v1561
    %v1667 = vunpack.c.l.bf16 %v1562
    %v1668 = vunpack.c.h.bf16 %v1562
    %v1669 = vunpack.c.l.bf16 %v1563
    %v1670 = vunpack.c.l.bf16 %v1564
    %v1671 = vunpack.c.h.bf16 %v1564
    %v1672 = vunpack.c.l.bf16 %v1565
    %v1673 = vunpack.c.l.bf16 %v1566
    %v1674 = vunpack.c.h.bf16 %v1566
    %v1675 = vunpack.c.l.bf16 %v1567
    %v1676 = vunpack.c.l.bf16 %v1568
    %v1677 = vunpack.c.h.bf16 %v1568
    %v1678 = vunpack.c.l.bf16 %v1569
    %v1679 = vunpack.c.l.bf16 %v1570
    %v1680 = vunpack.c.h.bf16 %v1570
    %v1681 = vunpack.c.l.bf16 %v1571
    %v1682 = vunpack.c.l.bf16 %v1572
    %v1683 = vunpack.c.h.bf16 %v1572
    %v1684 = vunpack.c.l.bf16 %v1573
    %v1685 = vunpack.c.l.bf16 %v1574
    %v1686 = vunpack.c.h.bf16 %v1574
    %v1687 = vunpack.c.l.bf16 %v1575
    %v1688 = vunpack.c.l.bf16 %v1576
    %v1689 = vunpack.c.h.bf16 %v1576
    %v1690 = vunpack.c.l.bf16 %v1577
    %v1691 = vunpack.c.l.bf16 %v1578
    %v1692 = vunpack.c.h.bf16 %v1578
    %v1693 = vunpack.c.l.bf16 %v1579
    %v1694 = vunpack.c.l.bf16 %v1580
    %v1695 = vunpack.c.h.bf16 %v1580
    %v1696 = vunpack.c.l.bf16 %v1581
    %v1697 = vunpack.c.l.bf16 %v1582
    %v1698 = vunpack.c.h.bf16 %v1582
    %v1699 = vunpack.c.l.bf16 %v1583
    %v1700 = vunpack.c.l.bf16 %v1584
    %v1701 = vunpack.c.h.bf16 %v1584
    %v1702 = vunpack.c.l.bf16 %v1585
    %v1703 = vunpack.c.l.bf16 %v1586
    %v1704 = vunpack.c.h.bf16 %v1586
    %v1705 = vunpack.c.l.bf16 %v1587
    %v1706 = vunpack.c.l.bf16 %v1588
    %v1707 = vunpack.c.h.bf16 %v1588
    %v1708 = vunpack.c.l.bf16 %v1589
    %v1709 = vunpack.c.l.bf16 %v1590
    %v1710 = vunpack.c.h.bf16 %v1590
    %v1711 = vunpack.c.l.bf16 %v1591
    %v1712 = vunpack.c.l.bf16 %v1592
    %v1713 = vunpack.c.h.bf16 %v1592
    %v1714 = vunpack.c.l.bf16 %v1593
    %v1715 = vunpack.c.l.bf16 %v1594
    %v1716 = vunpack.c.h.bf16 %v1594
    %v1717 = vunpack.c.l.bf16 %v1595
    %v1718 = vunpack.c.l.bf16 %v1596
    %v1719 = vunpack.c.h.bf16 %v1596
    %v1720 = vunpack.c.l.bf16 %v1597
    %v1721 = vunpack.c.l.bf16 %v1598
    %v1722 = vunpack.c.h.bf16 %v1598
    %v1723 = vunpack.c.l.bf16 %v1599
    %v1724 = vunpack.c.l.bf16 %v1600
    %v1725 = vunpack.c.h.bf16 %v1600
    %v1726 = vunpack.c.l.bf16 %v1601
    %v1727 = vunpack.c.l.bf16 %v1602
    %v1728 = vunpack.c.h.bf16 %v1602
    %v1729 = vunpack.c.l.bf16 %v1603
    %v1730 = vunpack.c.l.bf16 %v1604
    %v1731 = vunpack.c.h.bf16 %v1604
    %v1732 = vunpack.c.l.bf16 %v1605
    %v1733 = vunpack.c.l.bf16 %v1606
    %v1734 = vunpack.c.h.bf16 %v1606
    %v1735 = vunpack.c.l.bf16 %v1607
    %v1736 = vunpack.c.l.bf16 %v1608
    %v1737 = vunpack.c.h.bf16 %v1608
    %v1738 = vunpack.c.l.bf16 %v1609
    %v1739 = vunpack.c.l.bf16 %v1610
    %v1740 = vunpack.c.h.bf16 %v1610
    %v1741 = vunpack.c.l.bf16 %v1611
    %v1742 = vunpack.c.l.bf16 %v1612
    %v1743 = vunpack.c.h.bf16 %v1612
    %v1744 = vunpack.c.l.bf16 %v1613
    %v1745 = vunpack.c.l.bf16 %v1614
    %v1746 = vunpack.c.h.bf16 %v1614
    %v1747 = vunpack.c.l.bf16 %v1615
    %v1748 = vunpack.c.l.bf16 %v1616
    %v1749 = vunpack.c.h.bf16 %v1616
    %v1750 = vunpack.c.l.bf16 %v1617
    %v1751 = vunpack.c.l.bf16 %v1618
    %v1752 = vunpack.c.h.bf16 %v1618
    %v1753 = vunpack.c.l.bf16 %v1619
    %v1754 = vunpack.c.l.bf16 %v1620
    %v1755 = vunpack.c.h.bf16 %v1620
    %v1756 = vunpack.c.l.bf16 %v1621
    %v1757 = vunpack.c.l.bf16 %v1622
    %v1758 = vunpack.c.h.bf16 %v1622
    %v1759 = vunpack.c.l.bf16 %v1623
    %v1760 = vunpack.c.l.bf16 %v1624
    %v1761 = vunpack.c.h.bf16 %v1624
    %v1762 = vunpack.c.l.bf16 %v1625
    %v1763 = vunpack.c.l.bf16 %v1626
    %v1764 = vunpack.c.h.bf16 %v1626
    %v1765 = vunpack.c.l.bf16 %v1627
    %v1766 = vunpack.c.l.bf16 %v1628
    %v1767 = vunpack.c.h.bf16 %v1628
    %v1768 = vunpack.c.l.bf16 %v1629
    %v1769 = vunpack.c.l.bf16 %v1630
    %v1770 = vunpack.c.h.bf16 %v1630
    %v1771 = vunpack.c.l.bf16 %v1631
    %v1772 = vunpack.c.l.bf16 %v1632
    %v1773 = vunpack.c.h.bf16 %v1632
    %v1774 = vunpack.c.l.bf16 %v1633
    %v1775 = vunpack.c.l.bf16 %v1634
    %v1776 = vunpack.c.h.bf16 %v1634
    %v1777 = vunpack.c.l.bf16 %v1635
    %v1778 = vunpack.c.l.bf16 %v1636
    %v1779 = vunpack.c.h.bf16 %v1636
    %v1780 = vunpack.c.l.bf16 %v1637
    %v1781 = vunpack.c.l.bf16 %v1638
    %v1782 = vunpack.c.h.bf16 %v1638
    %v1783 = vunpack.c.l.bf16 %v1639
    %v1784 = vunpack.c.l.bf16 %v1640
    %v1785 = vunpack.c.h.bf16 %v1640
    %v1786 = vunpack.c.l.bf16 %v1641
    %v1787 = vunpack.c.l.bf16 %v1642
    %v1788 = vunpack.c.h.bf16 %v1642
    %v1789 = vunpack.c.l.bf16 %v1643
    %v1790 = vunpack.c.l.bf16 %v1644
    %v1791 = vunpack.c.h.bf16 %v1644
    %v1792 = vunpack.c.l.bf16 %v1645
    %v1793 = vunpack.c.l.bf16 %v1646
    %v1794 = vunpack.c.h.bf16 %v1646
    %v1795 = vunpack.c.l.bf16 %v1647
    %v1796 = vunpack.c.l.bf16 %v1648
    %v1797 = vunpack.c.h.bf16 %v1648
    %v1798 = vunpack.c.l.bf16 %v1649
    %v1799 = vunpack.c.l.bf16 %v1650
    %v1800 = vunpack.c.h.bf16 %v1650
    %v1801 = vunpack.c.l.bf16 %v1651
    %v1802 = vld [vmem:[%s13] sm:$0x7]
    %v1804 = vlaneseq
    %v1805 = vshrl.u32 %v1804, 7
    %v1806 = vsub.s32 0, %v1805
    %v1807 = vrot.slane %v1802, %v1806
    %v1808 = vlaneseq
    %v1809 = vshrl.u32 %v1808, 7
    %v1810 = vsub.s32 1, %v1809
    %v1811 = vrot.slane %v1802, %v1810
    %v1812 = vlaneseq
    %v1813 = vshrl.u32 %v1812, 7
    %v1814 = vsub.s32 2, %v1813
    %v1815 = vrot.slane %v1802, %v1814
    %v1820 = vsel %vm698, %v1551, 0
    %1822 = vmatprep.subr.mxu0 %v1653
    %1823 = vmatpush1.msra.mxu0 %v1652
    %1824 = vmatprep.subr.mxu0 %v1656
    %1825 = vmatpush1.msra.mxu0 %v1655
    %1826 = vmatprep.subr.mxu0 %v1659
    %1827 = vmatpush1.msra.mxu0 %v1658
    %1828 = vmatprep.subr.mxu0 %v1662
    %1829 = vmatpush1.msra.mxu0 %v1661
    %1830 = vmatprep.subr.mxu0 %v1665
    %1831 = vmatpush1.msra.mxu0 %v1664
    %1832 = vmatprep.subr.mxu0 %v1668
    %1833 = vmatpush1.msra.mxu0 %v1667
    %1834 = vmatprep.subr.mxu0 %v1671
    %1835 = vmatpush1.msra.mxu0 %v1670
    %1836 = vmatprep.subr.mxu0 %v1674
    %1837 = vmatpush1.msra.mxu0 %v1673
    %1838 = vmatprep.subr.mxu0 %v1677
    %1839 = vmatpush1.msra.mxu0 %v1676
    %1840 = vmatprep.subr.mxu0 %v1680
    %1841 = vmatpush1.msra.mxu0 %v1679
    %1842 = vmatprep.subr.mxu0 %v1683
    %1843 = vmatpush1.msra.mxu0 %v1682
    %1844 = vmatprep.subr.mxu0 %v1686
    %1845 = vmatpush1.msra.mxu0 %v1685
    %1846 = vmatprep.subr.mxu0 %v1689
    %1847 = vmatpush1.msra.mxu0 %v1688
    %1848 = vmatprep.subr.mxu0 %v1692
    %1849 = vmatpush1.msra.mxu0 %v1691
    %1850 = vmatprep.subr.mxu0 %v1695
    %1851 = vmatpush1.msra.mxu0 %v1694
    %1852 = vmatprep.subr.mxu0 %v1698
    %1853 = vmatpush1.msra.mxu0 %v1697
    %1854 = vmatprep.subr.mxu0 %v1701
    %1855 = vmatpush1.msra.mxu0 %v1700
    %1856 = vmatprep.subr.mxu0 %v1704
    %1857 = vmatpush1.msra.mxu0 %v1703
    %1858 = vmatprep.subr.mxu0 %v1707
    %1859 = vmatpush1.msra.mxu0 %v1706
    %1860 = vmatprep.subr.mxu0 %v1710
    %1861 = vmatpush1.msra.mxu0 %v1709
    %1862 = vmatprep.subr.mxu0 %v1713
    %1863 = vmatpush1.msra.mxu0 %v1712
    %1864 = vmatprep.subr.mxu0 %v1716
    %1865 = vmatpush1.msra.mxu0 %v1715
    %1866 = vmatprep.subr.mxu0 %v1719
    %1867 = vmatpush1.msra.mxu0 %v1718
    %1868 = vmatprep.subr.mxu0 %v1722
    %1869 = vmatpush1.msra.mxu0 %v1721
    %1870 = vmatprep.subr.mxu0 %v1725
    %1871 = vmatpush1.msra.mxu0 %v1724
    %1872 = vmatprep.subr.mxu0 %v1728
    %1873 = vmatpush1.msra.mxu0 %v1727
    %1874 = vmatprep.subr.mxu0 %v1731
    %1875 = vmatpush1.msra.mxu0 %v1730
    %1876 = vmatprep.subr.mxu0 %v1734
    %1877 = vmatpush1.msra.mxu0 %v1733
    %1878 = vmatprep.subr.mxu0 %v1737
    %1879 = vmatpush1.msra.mxu0 %v1736
    %1880 = vmatprep.subr.mxu0 %v1740
    %1881 = vmatpush1.msra.mxu0 %v1739
    %1882 = vmatprep.subr.mxu0 %v1743
    %1883 = vmatpush1.msra.mxu0 %v1742
    %1884 = vmatprep.subr.mxu0 %v1746
    %1885 = vmatpush1.msra.mxu0 %v1745
    %1886 = vmatprep.mubr.f32.mxu0 %v1549
    %1887 = vmatmul.mubr.f32.gmra.mrb[0].mxu0 %v1548
    %v1888 = vpop.f32.mrb[0].mxu0
    %v1889 = vadd.f32 %v1807, %v1888
    %v1890 = vpop.f32.mrb[0].mxu0
    %v1891 = vadd.f32 %v1811, %v1890
    %1892 = vdwg.mxu0
    %1893 = vmatprep.subr.mxu0 %v1749
    %1894 = vmatpush1.msra.mxu0 %v1748
    %1895 = vmatprep.subr.mxu0 %v1752
    %1896 = vmatpush1.msra.mxu0 %v1751
    %1897 = vmatprep.subr.mxu0 %v1755
    %1898 = vmatpush1.msra.mxu0 %v1754
    %1899 = vmatprep.subr.mxu0 %v1758
    %1900 = vmatpush1.msra.mxu0 %v1757
    %1901 = vmatprep.subr.mxu0 %v1761
    %1902 = vmatpush1.msra.mxu0 %v1760
    %1903 = vmatprep.subr.mxu0 %v1764
    %1904 = vmatpush1.msra.mxu0 %v1763
    %1905 = vmatprep.subr.mxu0 %v1767
    %1906 = vmatpush1.msra.mxu0 %v1766
    %1907 = vmatprep.subr.mxu0 %v1770
    %1908 = vmatpush1.msra.mxu0 %v1769
    %1909 = vmatprep.subr.mxu0 %v1773
    %1910 = vmatpush1.msra.mxu0 %v1772
    %1911 = vmatprep.subr.mxu0 %v1776
    %1912 = vmatpush1.msra.mxu0 %v1775
    %1913 = vmatprep.subr.mxu0 %v1779
    %1914 = vmatpush1.msra.mxu0 %v1778
    %1915 = vmatprep.subr.mxu0 %v1782
    %1916 = vmatpush1.msra.mxu0 %v1781
    %1917 = vmatprep.subr.mxu0 %v1785
    %1918 = vmatpush1.msra.mxu0 %v1784
    %1919 = vmatprep.subr.mxu0 %v1788
    %1920 = vmatpush1.msra.mxu0 %v1787
    %1921 = vmatprep.subr.mxu0 %v1791
    %1922 = vmatpush1.msra.mxu0 %v1790
    %1923 = vmatprep.subr.mxu0 %v1794
    %1924 = vmatpush1.msra.mxu0 %v1793
    %1925 = vmatprep.subr.mxu0 %v1797
    %1926 = vmatpush1.msra.mxu0 %v1796
    %1927 = vmatprep.subr.mxu0 %v1800
    %1928 = vmatpush1.msra.mxu0 %v1799
    %1929 = vmatprep.subr.mxu0 0.0
    %1930 = vmatpush1.msra.mxu0 0.0
    %1931 = vmatprep.subr.mxu0 0.0
    %1932 = vmatpush1.msra.mxu0 0.0
    %1933 = vmatprep.subr.mxu0 0.0
    %1934 = vmatpush1.msra.mxu0 0.0
    %1935 = vmatprep.subr.mxu0 0.0
    %1936 = vmatpush1.msra.mxu0 0.0
    %1937 = vmatprep.subr.mxu0 0.0
    %1938 = vmatpush1.msra.mxu0 0.0
    %1939 = vmatprep.subr.mxu0 0.0
    %1940 = vmatpush1.msra.mxu0 0.0
    %1941 = vmatprep.subr.mxu0 0.0
    %1942 = vmatpush1.msra.mxu0 0.0
    %1943 = vmatprep.subr.mxu0 0.0
    %1944 = vmatpush1.msra.mxu0 0.0
    %1945 = vmatprep.subr.mxu0 0.0
    %1946 = vmatpush1.msra.mxu0 0.0
    %1947 = vmatprep.subr.mxu0 0.0
    %1948 = vmatpush1.msra.mxu0 0.0
    %1949 = vmatprep.subr.mxu0 0.0
    %1950 = vmatpush1.msra.mxu0 0.0
    %1951 = vmatprep.subr.mxu0 0.0
    %1952 = vmatpush1.msra.mxu0 0.0
    %1953 = vmatprep.subr.mxu0 0.0
    %1954 = vmatpush1.msra.mxu0 0.0
    %1955 = vmatprep.subr.mxu0 0.0
    %1956 = vmatpush1.msra.mxu0 0.0
    %1957 = vmatprep.mubr.f32.mxu0 %v1820
    %1958 = vmatmul.mubr.f32.gmra.mrb[0].mxu0 %v1550
    %v1959 = vpop.f32.mrb[0].mxu0
    %v1960 = vadd.f32 %v1889, %v1959
    %v1961 = vpop.f32.mrb[0].mxu0
    %v1962 = vadd.f32 %v1891, %v1961
    %1963 = vdwg.mxu0
    %1964 = vmatprep.subr.mxu0 0.0
    %1965 = vmatpush1.msra.mxu0 %v1654
    %1966 = vmatprep.subr.mxu0 0.0
    %1967 = vmatpush1.msra.mxu0 %v1657
    %1968 = vmatprep.subr.mxu0 0.0
    %1969 = vmatpush1.msra.mxu0 %v1660
    %1970 = vmatprep.subr.mxu0 0.0
    %1971 = vmatpush1.msra.mxu0 %v1663
    %1972 = vmatprep.subr.mxu0 0.0
    %1973 = vmatpush1.msra.mxu0 %v1666
    %1974 = vmatprep.subr.mxu0 0.0
    %1975 = vmatpush1.msra.mxu0 %v1669
    %1976 = vmatprep.subr.mxu0 0.0
    %1977 = vmatpush1.msra.mxu0 %v1672
    %1978 = vmatprep.subr.mxu0 0.0
    %1979 = vmatpush1.msra.mxu0 %v1675
    %1980 = vmatprep.subr.mxu0 0.0
    %1981 = vmatpush1.msra.mxu0 %v1678
    %1982 = vmatprep.subr.mxu0 0.0
    %1983 = vmatpush1.msra.mxu0 %v1681
    %1984 = vmatprep.subr.mxu0 0.0
    %1985 = vmatpush1.msra.mxu0 %v1684
    %1986 = vmatprep.subr.mxu0 0.0
    %1987 = vmatpush1.msra.mxu0 %v1687
    %1988 = vmatprep.subr.mxu0 0.0
    %1989 = vmatpush1.msra.mxu0 %v1690
    %1990 = vmatprep.subr.mxu0 0.0
    %1991 = vmatpush1.msra.mxu0 %v1693
    %1992 = vmatprep.subr.mxu0 0.0
    %1993 = vmatpush1.msra.mxu0 %v1696
    %1994 = vmatprep.subr.mxu0 0.0
    %1995 = vmatpush1.msra.mxu0 %v1699
    %1996 = vmatprep.subr.mxu0 0.0
    %1997 = vmatpush1.msra.mxu0 %v1702
    %1998 = vmatprep.subr.mxu0 0.0
    %1999 = vmatpush1.msra.mxu0 %v1705
    %2000 = vmatprep.subr.mxu0 0.0
    %2001 = vmatpush1.msra.mxu0 %v1708
    %2002 = vmatprep.subr.mxu0 0.0
    %2003 = vmatpush1.msra.mxu0 %v1711
    %2004 = vmatprep.subr.mxu0 0.0
    %2005 = vmatpush1.msra.mxu0 %v1714
    %2006 = vmatprep.subr.mxu0 0.0
    %2007 = vmatpush1.msra.mxu0 %v1717
    %2008 = vmatprep.subr.mxu0 0.0
    %2009 = vmatpush1.msra.mxu0 %v1720
    %2010 = vmatprep.subr.mxu0 0.0
    %2011 = vmatpush1.msra.mxu0 %v1723
    %2012 = vmatprep.subr.mxu0 0.0
    %2013 = vmatpush1.msra.mxu0 %v1726
    %2014 = vmatprep.subr.mxu0 0.0
    %2015 = vmatpush1.msra.mxu0 %v1729
    %2016 = vmatprep.subr.mxu0 0.0
    %2017 = vmatpush1.msra.mxu0 %v1732
    %2018 = vmatprep.subr.mxu0 0.0
    %2019 = vmatpush1.msra.mxu0 %v1735
    %2020 = vmatprep.subr.mxu0 0.0
    %2021 = vmatpush1.msra.mxu0 %v1738
    %2022 = vmatprep.subr.mxu0 0.0
    %2023 = vmatpush1.msra.mxu0 %v1741
    %2024 = vmatprep.subr.mxu0 0.0
    %2025 = vmatpush1.msra.mxu0 %v1744
    %2026 = vmatprep.subr.mxu0 0.0
    %2027 = vmatpush1.msra.mxu0 %v1747
    %2028 = vmatprep.mubr.f32.mxu0 %v1549
    %2029 = vmatmul.mubr.f32.gmra.mrb[0].mxu0 %v1548
    %v2030 = vpop.f32.mrb[0].mxu0
    %v2031 = vadd.f32 %v1815, %v2030
    %v2032 = vpop.f32.mrb[0].mxu0
    %2033 = vdwg.mxu0
    %2034 = vmatprep.subr.mxu0 0.0
    %2035 = vmatpush1.msra.mxu0 %v1750
    %2036 = vmatprep.subr.mxu0 0.0
    %2037 = vmatpush1.msra.mxu0 %v1753
    %2038 = vmatprep.subr.mxu0 0.0
    %2039 = vmatpush1.msra.mxu0 %v1756
    %2040 = vmatprep.subr.mxu0 0.0
    %2041 = vmatpush1.msra.mxu0 %v1759
    %2042 = vmatprep.subr.mxu0 0.0
    %2043 = vmatpush1.msra.mxu0 %v1762
    %2044 = vmatprep.subr.mxu0 0.0
    %2045 = vmatpush1.msra.mxu0 %v1765
    %2046 = vmatprep.subr.mxu0 0.0
    %2047 = vmatpush1.msra.mxu0 %v1768
    %2048 = vmatprep.subr.mxu0 0.0
    %2049 = vmatpush1.msra.mxu0 %v1771
    %2050 = vmatprep.subr.mxu0 0.0
    %2051 = vmatpush1.msra.mxu0 %v1774
    %2052 = vmatprep.subr.mxu0 0.0
    %2053 = vmatpush1.msra.mxu0 %v1777
    %2054 = vmatprep.subr.mxu0 0.0
    %2055 = vmatpush1.msra.mxu0 %v1780
    %2056 = vmatprep.subr.mxu0 0.0
    %2057 = vmatpush1.msra.mxu0 %v1783
    %2058 = vmatprep.subr.mxu0 0.0
    %2059 = vmatpush1.msra.mxu0 %v1786
    %2060 = vmatprep.subr.mxu0 0.0
    %2061 = vmatpush1.msra.mxu0 %v1789
    %2062 = vmatprep.subr.mxu0 0.0
    %2063 = vmatpush1.msra.mxu0 %v1792
    %2064 = vmatprep.subr.mxu0 0.0
    %2065 = vmatpush1.msra.mxu0 %v1795
    %2066 = vmatprep.subr.mxu0 0.0
    %2067 = vmatpush1.msra.mxu0 %v1798
    %2068 = vmatprep.subr.mxu0 0.0
    %2069 = vmatpush1.msra.mxu0 %v1801
    %2070 = vmatprep.subr.mxu0 0.0
    %2071 = vmatpush1.msra.mxu0 0.0
    %2072 = vmatprep.subr.mxu0 0.0
    %2073 = vmatpush1.msra.mxu0 0.0
    %2074 = vmatprep.subr.mxu0 0.0
    %2075 = vmatpush1.msra.mxu0 0.0
    %2076 = vmatprep.subr.mxu0 0.0
    %2077 = vmatpush1.msra.mxu0 0.0
    %2078 = vmatprep.subr.mxu0 0.0
    %2079 = vmatpush1.msra.mxu0 0.0
    %2080 = vmatprep.subr.mxu0 0.0
    %2081 = vmatpush1.msra.mxu0 0.0
    %2082 = vmatprep.subr.mxu0 0.0
    %2083 = vmatpush1.msra.mxu0 0.0
    %2084 = vmatprep.subr.mxu0 0.0
    %2085 = vmatpush1.msra.mxu0 0.0
    %2086 = vmatprep.subr.mxu0 0.0
    %2087 = vmatpush1.msra.mxu0 0.0
    %2088 = vmatprep.subr.mxu0 0.0
    %2089 = vmatpush1.msra.mxu0 0.0
    %2090 = vmatprep.subr.mxu0 0.0
    %2091 = vmatpush1.msra.mxu0 0.0
    %2092 = vmatprep.subr.mxu0 0.0
    %2093 = vmatpush1.msra.mxu0 0.0
    %2094 = vmatprep.subr.mxu0 0.0
    %2095 = vmatpush1.msra.mxu0 0.0
    %2096 = vmatprep.subr.mxu0 0.0
    %2097 = vmatpush1.msra.mxu0 0.0
    %2098 = vmatprep.mubr.f32.mxu0 %v1820
    %2099 = vmatmul.mubr.f32.gmra.mrb[0].mxu0 %v1550
    %v2100 = vpop.f32.mrb[0].mxu0
    %v2101 = vadd.f32 %v2031, %v2100
    %v2102 = vpop.f32.mrb[0].mxu0
    %2103 = vdwg.mxu0
    %v2104 = vmax.f32 %v1960, 0.0
    %v2105 = vmax.f32 %v1962, 0.0
    %v2106 = vmax.f32 %v2101, 0.0
    %v2107 = vld [vmem:[%s14] sm:$0xf]
    %v2108 = vld [vmem:[%s14 + $0x4] sm:$0xf]
    %v2109 = vld [vmem:[%s14 + $0x8] sm:$0xf]
    %v2110 = vld [vmem:[%s14 + $0xc] sm:$0xf]
    %v2111 = vld [vmem:[%s14 + $0x10] sm:$0xf]
    %v2112 = vld [vmem:[%s14 + $0x14] sm:$0xf]
    %v2113 = vld [vmem:[%s14 + $0x18] sm:$0xf]
    %v2114 = vld [vmem:[%s14 + $0x1c] sm:$0xf]
    %v2115 = vld [vmem:[%s14 + $0x20] sm:$0xf]
    %v2116 = vld [vmem:[%s14 + $0x24] sm:$0xf]
    %v2117 = vld [vmem:[%s14 + $0x28] sm:$0xf]
    %v2118 = vld [vmem:[%s14 + $0x2c] sm:$0xf]
    %v2119 = vld [vmem:[%s14 + $0x30] sm:$0xf]
    %v2120 = vld [vmem:[%s14 + $0x34] sm:$0xf]
    %v2121 = vld [vmem:[%s14 + $0x38] sm:$0xf]
    %v2122 = vld [vmem:[%s14 + $0x3c] sm:$0xf]
    %v2123 = vld [vmem:[%s14 + $0x40] sm:$0xf]
    %v2124 = vld [vmem:[%s14 + $0x44] sm:$0xf]
    %v2125 = vld [vmem:[%s14 + $0x48] sm:$0xf]
    %v2126 = vld [vmem:[%s14 + $0x4c] sm:$0xf]
    %v2127 = vld [vmem:[%s14 + $0x50] sm:$0xf]
    %v2128 = vld [vmem:[%s14 + $0x54] sm:$0xf]
    %v2129 = vld [vmem:[%s14 + $0x58] sm:$0xf]
    %v2130 = vld [vmem:[%s14 + $0x5c] sm:$0xf]
    %v2131 = vld [vmem:[%s14 + $0x60] sm:$0xf]
    %v2132 = vld [vmem:[%s14 + $0x64] sm:$0xf]
    %v2133 = vld [vmem:[%s14 + $0x68] sm:$0xf]
    %v2134 = vld [vmem:[%s14 + $0x6c] sm:$0xf]
    %v2135 = vld [vmem:[%s14 + $0x70] sm:$0xf]
    %v2136 = vld [vmem:[%s14 + $0x74] sm:$0xf]
    %v2137 = vld [vmem:[%s14 + $0x78] sm:$0xf]
    %v2138 = vld [vmem:[%s14 + $0x7c] sm:$0xf]
    %v2139 = vld [vmem:[%s14 + $0x80] sm:$0xf]
    %v2140 = vld [vmem:[%s14 + $0x84] sm:$0xf]
    %v2141 = vld [vmem:[%s14 + $0x88] sm:$0xf]
    %v2142 = vld [vmem:[%s14 + $0x8c] sm:$0xf]
    %v2143 = vld [vmem:[%s14 + $0x90] sm:$0xf]
    %v2144 = vld [vmem:[%s14 + $0x94] sm:$0x3]
    %v2145 = vunpack.c.l.bf16 %v2107
    %v2146 = vunpack.c.l.bf16 %v2108
    %v2147 = vunpack.c.l.bf16 %v2109
    %v2148 = vunpack.c.l.bf16 %v2110
    %v2149 = vunpack.c.l.bf16 %v2111
    %v2150 = vunpack.c.l.bf16 %v2112
    %v2151 = vunpack.c.l.bf16 %v2113
    %v2152 = vunpack.c.l.bf16 %v2114
    %v2153 = vunpack.c.l.bf16 %v2115
    %v2154 = vunpack.c.l.bf16 %v2116
    %v2155 = vunpack.c.l.bf16 %v2117
    %v2156 = vunpack.c.l.bf16 %v2118
    %v2157 = vunpack.c.l.bf16 %v2119
    %v2158 = vunpack.c.l.bf16 %v2120
    %v2159 = vunpack.c.l.bf16 %v2121
    %v2160 = vunpack.c.l.bf16 %v2122
    %v2161 = vunpack.c.l.bf16 %v2123
    %v2162 = vunpack.c.l.bf16 %v2124
    %v2163 = vunpack.c.l.bf16 %v2125
    %v2164 = vunpack.c.l.bf16 %v2126
    %v2165 = vunpack.c.l.bf16 %v2127
    %v2166 = vunpack.c.l.bf16 %v2128
    %v2167 = vunpack.c.l.bf16 %v2129
    %v2168 = vunpack.c.l.bf16 %v2130
    %v2169 = vunpack.c.l.bf16 %v2131
    %v2170 = vunpack.c.l.bf16 %v2132
    %v2171 = vunpack.c.l.bf16 %v2133
    %v2172 = vunpack.c.l.bf16 %v2134
    %v2173 = vunpack.c.l.bf16 %v2135
    %v2174 = vunpack.c.l.bf16 %v2136
    %v2175 = vunpack.c.l.bf16 %v2137
    %v2176 = vunpack.c.l.bf16 %v2138
    %v2177 = vunpack.c.l.bf16 %v2139
    %v2178 = vunpack.c.l.bf16 %v2140
    %v2179 = vunpack.c.l.bf16 %v2141
    %v2180 = vunpack.c.l.bf16 %v2142
    %v2181 = vunpack.c.l.bf16 %v2143
    %v2182 = vunpack.c.l.bf16 %v2144
    %v2183 = vld [vmem:[#allocation3] sm:$0x1]
    %v2185 = vlaneseq
    %v2186 = vshrl.u32 %v2185, 7
    %v2187 = vsub.s32 0, %v2186
    %v2188 = vrot.slane %v2183, %v2187
    %v2191 = vsel %vm1070, %v2106, 0
    %v2194 = vsel %vm104, %v2182, 0
    %2196 = vmatprep.subr.mxu0 0.0
    %2197 = vmatpush1.msra.mxu0 %v2145
    %2198 = vmatprep.subr.mxu0 0.0
    %2199 = vmatpush1.msra.mxu0 %v2146
    %2200 = vmatprep.subr.mxu0 0.0
    %2201 = vmatpush1.msra.mxu0 %v2147
    %2202 = vmatprep.subr.mxu0 0.0
    %2203 = vmatpush1.msra.mxu0 %v2148
    %2204 = vmatprep.subr.mxu0 0.0
    %2205 = vmatpush1.msra.mxu0 %v2149
    %2206 = vmatprep.subr.mxu0 0.0
    %2207 = vmatpush1.msra.mxu0 %v2150
    %2208 = vmatprep.subr.mxu0 0.0
    %2209 = vmatpush1.msra.mxu0 %v2151
    %2210 = vmatprep.subr.mxu0 0.0
    %2211 = vmatpush1.msra.mxu0 %v2152
    %2212 = vmatprep.subr.mxu0 0.0
    %2213 = vmatpush1.msra.mxu0 %v2153
    %2214 = vmatprep.subr.mxu0 0.0
    %2215 = vmatpush1.msra.mxu0 %v2154
    %2216 = vmatprep.subr.mxu0 0.0
    %2217 = vmatpush1.msra.mxu0 %v2155
    %2218 = vmatprep.subr.mxu0 0.0
    %2219 = vmatpush1.msra.mxu0 %v2156
    %2220 = vmatprep.subr.mxu0 0.0
    %2221 = vmatpush1.msra.mxu0 %v2157
    %2222 = vmatprep.subr.mxu0 0.0
    %2223 = vmatpush1.msra.mxu0 %v2158
    %2224 = vmatprep.subr.mxu0 0.0
    %2225 = vmatpush1.msra.mxu0 %v2159
    %2226 = vmatprep.subr.mxu0 0.0
    %2227 = vmatpush1.msra.mxu0 %v2160
    %2228 = vmatprep.subr.mxu0 0.0
    %2229 = vmatpush1.msra.mxu0 %v2161
    %2230 = vmatprep.subr.mxu0 0.0
    %2231 = vmatpush1.msra.mxu0 %v2162
    %2232 = vmatprep.subr.mxu0 0.0
    %2233 = vmatpush1.msra.mxu0 %v2163
    %2234 = vmatprep.subr.mxu0 0.0
    %2235 = vmatpush1.msra.mxu0 %v2164
    %2236 = vmatprep.subr.mxu0 0.0
    %2237 = vmatpush1.msra.mxu0 %v2165
    %2238 = vmatprep.subr.mxu0 0.0
    %2239 = vmatpush1.msra.mxu0 %v2166
    %2240 = vmatprep.subr.mxu0 0.0
    %2241 = vmatpush1.msra.mxu0 %v2167
    %2242 = vmatprep.subr.mxu0 0.0
    %2243 = vmatpush1.msra.mxu0 %v2168
    %2244 = vmatprep.subr.mxu0 0.0
    %2245 = vmatpush1.msra.mxu0 %v2169
    %2246 = vmatprep.subr.mxu0 0.0
    %2247 = vmatpush1.msra.mxu0 %v2170
    %2248 = vmatprep.subr.mxu0 0.0
    %2249 = vmatpush1.msra.mxu0 %v2171
    %2250 = vmatprep.subr.mxu0 0.0
    %2251 = vmatpush1.msra.mxu0 %v2172
    %2252 = vmatprep.subr.mxu0 0.0
    %2253 = vmatpush1.msra.mxu0 %v2173
    %2254 = vmatprep.subr.mxu0 0.0
    %2255 = vmatpush1.msra.mxu0 %v2174
    %2256 = vmatprep.subr.mxu0 0.0
    %2257 = vmatpush1.msra.mxu0 %v2175
    %2258 = vmatprep.subr.mxu0 0.0
    %2259 = vmatpush1.msra.mxu0 %v2176
    %2260 = vmatprep.mubr.f32.mxu0 %v2105
    %2261 = vmatmul.mubr.f32.gmra.mrb[0].mxu0 %v2104
    %v2262 = vpop.f32.mrb[0].mxu0
    %v2263 = vadd.f32 %v2188, %v2262
    %v2264 = vpop.f32.mrb[0].mxu0
    %2265 = vdwg.mxu0
    %2266 = vmatprep.subr.mxu0 0.0
    %2267 = vmatpush1.msra.mxu0 %v2177
    %2268 = vmatprep.subr.mxu0 0.0
    %2269 = vmatpush1.msra.mxu0 %v2178
    %2270 = vmatprep.subr.mxu0 0.0
    %2271 = vmatpush1.msra.mxu0 %v2179
    %2272 = vmatprep.subr.mxu0 0.0
    %2273 = vmatpush1.msra.mxu0 %v2180
    %2274 = vmatprep.subr.mxu0 0.0
    %2275 = vmatpush1.msra.mxu0 %v2181
    %2276 = vmatprep.subr.mxu0 0.0
    %2277 = vmatpush1.msra.mxu0 %v2194
    %2278 = vmatprep.subr.mxu0 0.0
    %2279 = vmatpush1.msra.mxu0 0.0
    %2280 = vmatprep.subr.mxu0 0.0
    %2281 = vmatpush1.msra.mxu0 0.0
    %2282 = vmatprep.subr.mxu0 0.0
    %2283 = vmatpush1.msra.mxu0 0.0
    %2284 = vmatprep.subr.mxu0 0.0
    %2285 = vmatpush1.msra.mxu0 0.0
    %2286 = vmatprep.subr.mxu0 0.0
    %2287 = vmatpush1.msra.mxu0 0.0
    %2288 = vmatprep.subr.mxu0 0.0
    %2289 = vmatpush1.msra.mxu0 0.0
    %2290 = vmatprep.subr.mxu0 0.0
    %2291 = vmatpush1.msra.mxu0 0.0
    %2292 = vmatprep.subr.mxu0 0.0
    %2293 = vmatpush1.msra.mxu0 0.0
    %2294 = vmatprep.subr.mxu0 0.0
    %2295 = vmatpush1.msra.mxu0 0.0
    %2296 = vmatprep.subr.mxu0 0.0
    %2297 = vmatpush1.msra.mxu0 0.0
    %2298 = vmatprep.subr.mxu0 0.0
    %2299 = vmatpush1.msra.mxu0 0.0
    %2300 = vmatprep.subr.mxu0 0.0
    %2301 = vmatpush1.msra.mxu0 0.0
    %2302 = vmatprep.subr.mxu0 0.0
    %2303 = vmatpush1.msra.mxu0 0.0
    %2304 = vmatprep.subr.mxu0 0.0
    %2305 = vmatpush1.msra.mxu0 0.0
    %2306 = vmatprep.subr.mxu0 0.0
    %2307 = vmatpush1.msra.mxu0 0.0
    %2308 = vmatprep.subr.mxu0 0.0
    %2309 = vmatpush1.msra.mxu0 0.0
    %2310 = vmatprep.subr.mxu0 0.0
    %2311 = vmatpush1.msra.mxu0 0.0
    %2312 = vmatprep.subr.mxu0 0.0
    %2313 = vmatpush1.msra.mxu0 0.0
    %2314 = vmatprep.subr.mxu0 0.0
    %2315 = vmatpush1.msra.mxu0 0.0
    %2316 = vmatprep.subr.mxu0 0.0
    %2317 = vmatpush1.msra.mxu0 0.0
    %2318 = vmatprep.subr.mxu0 0.0
    %2319 = vmatpush1.msra.mxu0 0.0
    %2320 = vmatprep.subr.mxu0 0.0
    %2321 = vmatpush1.msra.mxu0 0.0
    %2322 = vmatprep.subr.mxu0 0.0
    %2323 = vmatpush1.msra.mxu0 0.0
    %2324 = vmatprep.subr.mxu0 0.0
    %2325 = vmatpush1.msra.mxu0 0.0
    %2326 = vmatprep.subr.mxu0 0.0
    %2327 = vmatpush1.msra.mxu0 0.0
    %2328 = vmatprep.subr.mxu0 0.0
    %2329 = vmatpush1.msra.mxu0 0.0
    %2330 = vmatprep.mubr.f32.mxu0 0.0
    %2331 = vmatmul.mubr.f32.gmra.mrb[0].mxu0 %v2191
    %v2332 = vpop.f32.mrb[0].mxu0
    %v2333 = vadd.f32 %v2263, %v2332
    %v2334 = vpop.f32.mrb[0].mxu0
    %2335 = vdwg.mxu0
    %v2336 = vlaneseq
    %v2337 = vand.u32 %v2336, 127
    %vm2338 = vcmp.eq.s32.totalorder %v2337, 0
    %2340 = vset.pattern.permute.xlu0 0
    %2341 = vperm.xlu0 %2340, %v1214
    %v2342 = vpop.permute.xlu0 %2341
    %2345 = vset.pattern.permute.xlu0 0
    %2346 = vperm.xlu0 %2345, %v2333
    %v2347 = vpop.permute.xlu0 %2346
    %v2349 = vsel %vm2338, %v2342, %v2347
    %vm2350 = vcmask 9216
    %2351 = vst.msk [vmem:[%s16] sm:$0x3] %vm2350, %v2349
    // Predicated region
    $region74: #{critic_forward.1} parent=1 // pred_check
      _
    $region75: #{critic_forward.1} parent=1 // pred_check_branch
      %2353 = sbr.rel (0) target = $region77
    $region76: #{critic_forward.1} parent=1 // pred_region
      _
    $region77: #{critic_forward.1} parent=1 // pred_fallthru
      _
    // Predicated region
    $region78: #{critic_forward.1} parent=1 // pred_check
      _
    $region79: #{critic_forward.1} parent=1 // pred_check_branch
      %2355 = sbr.rel (0) target = $region81
    $region80: #{critic_forward.1} parent=1 // pred_region
      _
    $region81: #{critic_forward.1} parent=1 // pred_fallthru
      _
    %2356 = vsyncpa [#allocation5], 1
    %2357 = vsyncpa [#allocation7], 1

</llo_original>
